<compile_context>
chip_gen: v7x
topology: tpu7x:2x2x1
jax: 0.10.0
libtpu: 0.0.40
codegen_flags: <defaults>
</compile_context>

<pallas_src>
import math
import functools
import jax
import jax.numpy as jnp
from jax.experimental import pallas as pl
from jax.experimental.pallas import tpu as pltpu

LANE = 128
DEFAULT_N_TILE = 256        # token tile (lane axis); sweep 256-512 at real sizes
DEFAULT_VOCAB_TILE = 256    # vocab tile; 256 fills the v6e/v7x MXU (128 ok on v5e)
DIM_ALIGN = 16              # bf16 sublane granule; D is the contraction dim
_UNROLL_LIMIT = 8           # <= this many vocab tiles -> full Python unroll


def _round_up(x, m):
    return (x + m - 1) // m * m


def _aligned(off, align):
    """pl.multiple_of hint only for traced offsets; static ints pass through."""
    return off if isinstance(off, int) else pl.multiple_of(off, align)


def _maybe_fori(n_iters, body, init):
    """Python-unroll short vocab loops; lax.fori_loop(unroll=2) for long ones."""
    if n_iters <= _UNROLL_LIMIT:
        carry = init
        for i in range(n_iters):
            carry = body(i, carry)
        return carry
    return jax.lax.fori_loop(0, n_iters, body, init, unroll=2)


def _vmem_limit_bytes():
    """min(100 MiB, 3/4 of physical VMEM): ~96-100 MiB on v5e/v6e, ~48 MiB on v7x."""
    phys = 128 * 1024 * 1024
    try:
        phys = int(getattr(pltpu.get_tpu_info(), "vmem_capacity_bytes", phys))
    except Exception:
        pass
    return min(100 * 1024 * 1024, (phys * 3) // 4)


def critic_trainer_kernel(x_ref, mask_ref, valid_ref,
                          emb_mg_ref, w_mg_ref, emb_cr_ref, w_cr_ref,
                          out_ref,
                          *, mask_id, vocab_size, vocab_tile):
    # x_ref     : (1, NT) int32    original tokens, lane-dense
    # mask_ref  : (1, NT) float32  1.0 where token was masked
    # valid_ref : (1, NT) float32  1.0 for real (non-padded) token positions
    # emb_mg_ref: (Dp, Vp1p) bf16  maskgit embedding, transposed (vocab on lanes)
    # w_mg_ref  : (Vp, Dp)   bf16  maskgit output projection, transposed
    # emb_cr_ref: (Dp, Vp)   bf16  critic embedding, transposed
    # w_cr_ref  : (Dp, 1)    f32   critic head weights (column vector)
    # out_ref   : (1, NT)    f32   per-token BCE-with-logits contribution

    nt = x_ref.shape[-1]
    dp = emb_mg_ref.shape[0]
    vp1p = emb_mg_ref.shape[1]
    vp = w_mg_ref.shape[0]
    vt = vocab_tile

    x_tok = x_ref[...]                       # (1, NT) int32
    mask = mask_ref[...]                     # (1, NT) f32
    valid = valid_ref[...]                   # (1, NT) f32

    # masked_input = where(mask, mask_id, x)
    masked = jnp.where(mask > 0.5, jnp.int32(mask_id), x_tok)

    # Hoisted once: base (VT, NT) row-index iota shared by all three vocab loops.
    base_rows = jax.lax.broadcasted_iota(jnp.int32, (vt, nt), 0)

    # ---- maskgit embedding "gather": vocab-tiled bf16 one-hot matmul --------
    # (one-hot pickup is exact; for very large V a DMA row gather would be cheaper)
    def mg_gather_body(vi, h_acc):
        off = _aligned(vi * vt, vt)
        onehot = (base_rows + vi * vt == masked).astype(jnp.bfloat16)   # (VT, NT)
        return h_acc + jnp.dot(emb_mg_ref[:, pl.ds(off, vt)], onehot,
                               preferred_element_type=jnp.float32)
    h_t = _maybe_fori(vp1p // vt, mg_gather_body,
                      jnp.zeros((dp, nt), jnp.float32))                 # (Dp, NT)
    h_bf = jnp.tanh(h_t).astype(jnp.bfloat16)

    # ---- fused vocab-tiled logits + argmax (temperature == 0 path) ----------
    def argmax_body(vj, carry):
        run_max, run_arg = carry
        off = _aligned(vj * vt, vt)
        row_ids = base_rows + vj * vt
        logits_t = jnp.dot(w_mg_ref[pl.ds(off, vt), :], h_bf,
                           preferred_element_type=jnp.float32)          # (VT, NT)
        # mask padded vocab rows so they can never win the argmax
        logits_t = jnp.where(row_ids < vocab_size, logits_t, -jnp.inf)
        loc_max = jnp.max(logits_t, axis=0, keepdims=True)              # (1, NT)
        loc_arg = jnp.min(
            jnp.where(logits_t == loc_max, row_ids, jnp.int32(2 ** 30)),
            axis=0, keepdims=True)                                      # first match
        take = loc_max > run_max                                        # keep earlier idx on ties
        return (jnp.where(take, loc_max, run_max),
                jnp.where(take, loc_arg, run_arg))

    run_max0 = jnp.full((1, nt), -jnp.inf, jnp.float32)
    run_arg0 = jnp.zeros((1, nt), jnp.int32)
    _, pred_ids = _maybe_fori(vp // vt, argmax_body, (run_max0, run_arg0))

    # ---- critic_input = where(mask, pred_ids, x) ----------------------------
    critic_in = jnp.where(mask > 0.5, pred_ids, x_tok)

    # ---- critic embedding gather (vocab-tiled) -> tanh -----------------------
    def cr_gather_body(vi, h_acc):
        off = _aligned(vi * vt, vt)
        onehot = (base_rows + vi * vt == critic_in).astype(jnp.bfloat16)
        return h_acc + jnp.dot(emb_cr_ref[:, pl.ds(off, vt)], onehot,
                               preferred_element_type=jnp.float32)
    h2_t = jnp.tanh(_maybe_fori(vp // vt, cr_gather_body,
                                jnp.zeros((dp, nt), jnp.float32)))      # (Dp, NT)

    # ---- critic head: single-output projection on VPU + sublane reduce ------
    z = jnp.sum(h2_t * w_cr_ref[...], axis=0, keepdims=True)            # (1, NT)

    # ---- BCE-with-logits per-token contribution (padded tokens zeroed) ------
    y = mask
    elem = jnp.maximum(z, 0.0) - z * y + jnp.log(1.0 + jnp.exp(-jnp.abs(z)))
    out_ref[...] = elem * valid


def critic_trainer_forward(x, mask, params, *, n_tile=DEFAULT_N_TILE):
    """x: (B, S) int32 tokens; mask: (B, S) bool; returns scalar f32 loss."""
    b, s = x.shape
    n = b * s
    n_pad = _round_up(n, n_tile)
    g = n_pad // n_tile        # on v7x, g >= 2 is needed for both TCs to get work

    def pad_row(a, fill):
        flat = a.reshape(-1)
        flat = jnp.pad(flat, (0, n_pad - n), constant_values=fill)
        return flat.reshape(g, 1, n_tile)          # lane-dense token layout

    x_l = pad_row(x.astype(jnp.int32), 0)
    mask_l = pad_row(mask.astype(jnp.float32), 0.0)
    valid_l = pad_row(jnp.ones((b, s), jnp.float32), 0.0)

    kernel = functools.partial(
        critic_trainer_kernel,
        mask_id=int(params["mask_id"]),
        vocab_size=int(params["vocab_size"]),
        vocab_tile=int(params["vocab_tile"]))

    token_spec = pl.BlockSpec((None, 1, n_tile), lambda gi: (gi, 0, 0))

    def resident(arr):   # whole weight table, constant index map -> VMEM-resident
        # TODO(synk): for v7x at very large V, stream vocab tiles over a second
        # "arbitrary" grid axis instead of keeping the tables whole-resident.
        return pl.BlockSpec(arr.shape, lambda gi: (0, 0))

    per_token = pl.pallas_call(
        kernel,
        out_shape=jax.ShapeDtypeStruct((g, 1, n_tile), jnp.float32),
        grid=(g,),
        in_specs=[token_spec, token_spec, token_spec,
                  resident(params["emb_mg_t"]),
                  resident(params["w_mg_t"]),
                  resident(params["emb_cr_t"]),
                  resident(params["w_cr"])],
        out_specs=pl.BlockSpec((None, 1, n_tile), lambda gi: (gi, 0, 0)),
        compiler_params=pltpu.CompilerParams(
            dimension_semantics=("parallel",),
            vmem_limit_bytes=_vmem_limit_bytes()),
    )(x_l, mask_l, valid_l,
      params["emb_mg_t"], params["w_mg_t"], params["emb_cr_t"], params["w_cr"])

    # mean reduction of the BCE over the true (unpadded) token count
    return jnp.sum(per_token) / jnp.float32(n)


def make_params(key, num_tokens, dim, *, vocab_tile=DEFAULT_VOCAB_TILE,
                dim_align=DIM_ALIGN):
    k1, k2, k3, k4 = jax.random.split(key, 4)
    v = num_tokens
    vp = _round_up(v, vocab_tile)
    vp1p = _round_up(v + 1, vocab_tile)
    dp = _round_up(dim, dim_align)      # D is the contraction/sublane dim: 16 granule

    emb_mg = 0.1 * jax.random.normal(k1, (v + 1, dim), jnp.float32)
    w_mg = 0.1 * jax.random.normal(k2, (dim, v), jnp.float32)
    emb_cr = 0.1 * jax.random.normal(k3, (v, dim), jnp.float32)
    w_cr = 0.1 * jax.random.normal(k4, (dim, 1), jnp.float32)

    def pad2(a, r, c):
        return jnp.pad(a, ((0, r - a.shape[0]), (0, c - a.shape[1])))

    return {
        "mask_id": v,               # maskgit.mask_id == vocab size (extra emb row)
        "vocab_size": v,
        "vocab_tile": vocab_tile,
        # transposed, zero-padded, bf16 for the MXU (f32 accumulation in-kernel):
        "emb_mg_t": pad2(emb_mg.T, dp, vp1p).astype(jnp.bfloat16),  # (Dp, Vp1p)
        "w_mg_t":   pad2(w_mg.T, vp, dp).astype(jnp.bfloat16),      # (Vp, Dp)
        "emb_cr_t": pad2(emb_cr.T, dp, vp).astype(jnp.bfloat16),    # (Dp, Vp)
        "w_cr":     pad2(w_cr, dp, 1).astype(jnp.float32),          # (Dp, 1)
    }


def build_mask(key, batch, seq):
    """Cosine-schedule random masking, mirroring the torch host-side logic."""
    k_time, k_scores = jax.random.split(key)
    rand_time = jax.random.uniform(k_time, (1,))
    num_tokens_mask = jnp.clip(
        jnp.round(seq * jnp.cos(rand_time * math.pi * 0.5)).astype(jnp.int32),
        1, None)
    k = int(num_tokens_mask[0])                      # mirrors torch .item()
    scores = jax.random.normal(k_scores, (batch, seq))
    _, indices = jax.lax.top_k(scores, k)            # torch.randn(...).topk(k)
    mask = jnp.zeros((batch, seq), jnp.float32)
    mask = mask.at[jnp.arange(batch)[:, None], indices].set(1.0)
    return mask > 0.5


if __name__ == "__main__":
    batch, seq = 2, 8
    num_tokens, dim = 16, 32

    root = jax.random.PRNGKey(0)
    k_params, k_x, k_mask = jax.random.split(root, 3)

    params = make_params(k_params, num_tokens, dim)
    x = jax.random.randint(k_x, (batch, seq), 0, num_tokens, dtype=jnp.int32)
    mask = build_mask(k_mask, batch, seq)

    loss = critic_trainer_forward(x, mask, params)
    jax.block_until_ready(loss)
    assert loss.shape == () and bool(jnp.isfinite(loss))
    print("KERNEL_OK")
</pallas_src>

<mosaic_0001>
module attributes {stable_mosaic.version = 11 : i64} {
  func.func @critic_trainer_kernel(%arg0: i32, %arg1: memref<1x1x256xi32, #tpu.memory_space<vmem>>, %arg2: memref<1x1x256xf32, #tpu.memory_space<vmem>>, %arg3: memref<1x1x256xf32, #tpu.memory_space<vmem>>, %arg4: memref<32x256xbf16, #tpu.memory_space<vmem>>, %arg5: memref<256x32xbf16, #tpu.memory_space<vmem>>, %arg6: memref<32x256xbf16, #tpu.memory_space<vmem>>, %arg7: memref<32x1xf32, #tpu.memory_space<vmem>>, %arg8: memref<1x1x256xf32, #tpu.memory_space<vmem>>) attributes {dimension_semantics = [#tpu.dimension_semantics<parallel>], iteration_bounds = array<i64: 1>, scalar_prefetch = 0 : i64, scratch_operands = 0 : i64, tpu.core_type = #tpu.core_type<tc>, window_params = [{transform_indices = @transform_0, window_bounds = array<i64: 1, 1, 256>}, {transform_indices = @transform_1, window_bounds = array<i64: 1, 1, 256>}, {transform_indices = @transform_2, window_bounds = array<i64: 1, 1, 256>}, {pipeline_mode = #tpu.pipeline_mode<synchronous>, transform_indices = @transform_3, window_bounds = array<i64: 32, 256>}, {pipeline_mode = #tpu.pipeline_mode<synchronous>, transform_indices = @transform_4, window_bounds = array<i64: 256, 32>}, {pipeline_mode = #tpu.pipeline_mode<synchronous>, transform_indices = @transform_5, window_bounds = array<i64: 32, 256>}, {pipeline_mode = #tpu.pipeline_mode<synchronous>, transform_indices = @transform_6, window_bounds = array<i64: 32, 1>}, {transform_indices = @transform_7, window_bounds = array<i64: 1, 1, 256>}]} {
    %c0 = arith.constant 0 : index
    %c0_0 = arith.constant 0 : index
    %c0_1 = arith.constant 0 : index
    %0 = vector.load %arg1[%c0, %c0_0, %c0_1] : memref<1x1x256xi32, #tpu.memory_space<vmem>>, vector<1x1x256xi32>
    %1 = vector.shape_cast %0 : vector<1x1x256xi32> to vector<1x256xi32>
    %c0_2 = arith.constant 0 : index
    %c0_3 = arith.constant 0 : index
    %c0_4 = arith.constant 0 : index
    %2 = vector.load %arg2[%c0_2, %c0_3, %c0_4] : memref<1x1x256xf32, #tpu.memory_space<vmem>>, vector<1x1x256xf32>
    %3 = vector.shape_cast %2 : vector<1x1x256xf32> to vector<1x256xf32>
    %c0_5 = arith.constant 0 : index
    %c0_6 = arith.constant 0 : index
    %c0_7 = arith.constant 0 : index
    %4 = vector.load %arg3[%c0_5, %c0_6, %c0_7] : memref<1x1x256xf32, #tpu.memory_space<vmem>>, vector<1x1x256xf32>
    %5 = vector.shape_cast %4 : vector<1x1x256xf32> to vector<1x256xf32>
    %cst = arith.constant 5.000000e-01 : f32
    %6 = vector.broadcast %cst : f32 to vector<1x256xf32>
    %7 = arith.cmpf ogt, %3, %6 : vector<1x256xf32>
    %c16_i32 = arith.constant 16 : i32
    %8 = vector.broadcast %c16_i32 : i32 to vector<1x256xi32>
    %9 = arith.select %7, %8, %1 : vector<1x256xi1>, vector<1x256xi32>
    %10 = tpu.iota {dimensions = array<i32: 0>} : vector<256x256xi32>
    %cst_8 = arith.constant 0.000000e+00 : f32
    %11 = vector.broadcast %cst_8 : f32 to vector<32x256xf32>
    %c0_i32 = arith.constant 0 : i32
    %12 = vector.broadcast %c0_i32 : i32 to vector<256x256xi32>
    %13 = arith.addi %10, %12 : vector<256x256xi32>
    %14 = vector.broadcast %9 : vector<1x256xi32> to vector<256x256xi32>
    %15 = arith.cmpi eq, %13, %14 : vector<256x256xi32>
    %16 = arith.extui %15 : vector<256x256xi1> to vector<256x256xi32>
    %17 = arith.sitofp %16 : vector<256x256xi32> to vector<256x256xf32>
    %18 = arith.truncf %17 : vector<256x256xf32> to vector<256x256xbf16>
    %c0_9 = arith.constant 0 : index
    %c0_10 = arith.constant 0 : index
    %19 = vector.load %arg4[%c0_9, %c0_10] : memref<32x256xbf16, #tpu.memory_space<vmem>>, vector<32x256xbf16>
    %cst_11 = arith.constant dense<0.000000e+00> : vector<32x256xf32>
    %20 = tpu.matmul %19, %18, %cst_11 {dimension_numbers = #tpu.dot_dimension_numbers<[1], [0], [0], [1], [0, 0, 1, 1], [], []>} : vector<32x256xbf16>, vector<256x256xbf16>, vector<32x256xf32> -> vector<32x256xf32>
    %21 = arith.addf %11, %20 : vector<32x256xf32>
    %22 = math.tanh %21 : vector<32x256xf32>
    %23 = arith.truncf %22 : vector<32x256xf32> to vector<32x256xbf16>
    %cst_12 = arith.constant 0xFF800000 : f32
    %24 = vector.broadcast %cst_12 : f32 to vector<1x256xf32>
    %c0_i32_13 = arith.constant 0 : i32
    %25 = vector.broadcast %c0_i32_13 : i32 to vector<1x256xi32>
    %c0_i32_14 = arith.constant 0 : i32
    %26 = vector.broadcast %c0_i32_14 : i32 to vector<256x256xi32>
    %27 = arith.addi %10, %26 : vector<256x256xi32>
    %c0_15 = arith.constant 0 : index
    %c0_16 = arith.constant 0 : index
    %28 = vector.load %arg5[%c0_15, %c0_16] : memref<256x32xbf16, #tpu.memory_space<vmem>>, vector<256x32xbf16>
    %cst_17 = arith.constant dense<0.000000e+00> : vector<256x256xf32>
    %29 = tpu.matmul %28, %23, %cst_17 {dimension_numbers = #tpu.dot_dimension_numbers<[1], [0], [0], [1], [0, 0, 1, 1], [], []>} : vector<256x32xbf16>, vector<32x256xbf16>, vector<256x256xf32> -> vector<256x256xf32>
    %c16_i32_18 = arith.constant 16 : i32
    %30 = vector.broadcast %c16_i32_18 : i32 to vector<256x256xi32>
    %31 = arith.cmpi slt, %27, %30 : vector<256x256xi32>
    %cst_19 = arith.constant 0xFF800000 : f32
    %32 = vector.broadcast %cst_19 : f32 to vector<256x256xf32>
    %33 = arith.select %31, %29, %32 : vector<256x256xi1>, vector<256x256xf32>
    %cst_20 = arith.constant dense<0xFF800000> : vector<256xf32>
    %34 = vector.multi_reduction <maximumf>, %33, %cst_20 [0] : vector<256x256xf32> to vector<256xf32>
    %35 = vector.shape_cast %34 : vector<256xf32> to vector<1x256xf32>
    %36 = vector.broadcast %35 : vector<1x256xf32> to vector<256x256xf32>
    %37 = arith.cmpf oeq, %33, %36 : vector<256x256xf32>
    %c1073741824_i32 = arith.constant 1073741824 : i32
    %38 = vector.broadcast %c1073741824_i32 : i32 to vector<256x256xi32>
    %39 = arith.select %37, %27, %38 : vector<256x256xi1>, vector<256x256xi32>
    %cst_21 = arith.constant dense<2147483647> : vector<256xi32>
    %40 = vector.multi_reduction <minsi>, %39, %cst_21 [0] : vector<256x256xi32> to vector<256xi32>
    %41 = vector.shape_cast %40 : vector<256xi32> to vector<1x256xi32>
    %42 = arith.cmpf ogt, %35, %24 : vector<1x256xf32>
    %43 = arith.select %42, %41, %25 : vector<1x256xi1>, vector<1x256xi32>
    %cst_22 = arith.constant 5.000000e-01 : f32
    %44 = vector.broadcast %cst_22 : f32 to vector<1x256xf32>
    %45 = arith.cmpf ogt, %3, %44 : vector<1x256xf32>
    %46 = arith.select %45, %43, %1 : vector<1x256xi1>, vector<1x256xi32>
    %cst_23 = arith.constant 0.000000e+00 : f32
    %47 = vector.broadcast %cst_23 : f32 to vector<32x256xf32>
    %c0_i32_24 = arith.constant 0 : i32
    %48 = vector.broadcast %c0_i32_24 : i32 to vector<256x256xi32>
    %49 = arith.addi %10, %48 : vector<256x256xi32>
    %50 = vector.broadcast %46 : vector<1x256xi32> to vector<256x256xi32>
    %51 = arith.cmpi eq, %49, %50 : vector<256x256xi32>
    %52 = arith.extui %51 : vector<256x256xi1> to vector<256x256xi32>
    %53 = arith.sitofp %52 : vector<256x256xi32> to vector<256x256xf32>
    %54 = arith.truncf %53 : vector<256x256xf32> to vector<256x256xbf16>
    %c0_25 = arith.constant 0 : index
    %c0_26 = arith.constant 0 : index
    %55 = vector.load %arg6[%c0_25, %c0_26] : memref<32x256xbf16, #tpu.memory_space<vmem>>, vector<32x256xbf16>
    %cst_27 = arith.constant dense<0.000000e+00> : vector<32x256xf32>
    %56 = tpu.matmul %55, %54, %cst_27 {dimension_numbers = #tpu.dot_dimension_numbers<[1], [0], [0], [1], [0, 0, 1, 1], [], []>} : vector<32x256xbf16>, vector<256x256xbf16>, vector<32x256xf32> -> vector<32x256xf32>
    %57 = arith.addf %47, %56 : vector<32x256xf32>
    %58 = math.tanh %57 : vector<32x256xf32>
    %c0_28 = arith.constant 0 : index
    %c0_29 = arith.constant 0 : index
    %59 = vector.load %arg7[%c0_28, %c0_29] : memref<32x1xf32, #tpu.memory_space<vmem>>, vector<32x1xf32>
    %60 = vector.broadcast %59 : vector<32x1xf32> to vector<32x256xf32>
    %61 = arith.mulf %58, %60 : vector<32x256xf32>
    %cst_30 = arith.constant dense<0.000000e+00> : vector<256xf32>
    %62 = vector.multi_reduction <add>, %61, %cst_30 [0] : vector<32x256xf32> to vector<256xf32>
    %63 = vector.shape_cast %62 : vector<256xf32> to vector<1x256xf32>
    %cst_31 = arith.constant 0.000000e+00 : f32
    %64 = vector.broadcast %cst_31 : f32 to vector<1x256xf32>
    %65 = arith.maximumf %63, %64 : vector<1x256xf32>
    %66 = arith.mulf %63, %3 : vector<1x256xf32>
    %67 = arith.subf %65, %66 : vector<1x256xf32>
    %68 = math.absf %63 : vector<1x256xf32>
    %cst_32 = arith.constant 0.000000e+00 : f32
    %69 = vector.broadcast %cst_32 : f32 to vector<1x256xf32>
    %70 = arith.subf %69, %68 : vector<1x256xf32>
    %71 = math.exp %70 : vector<1x256xf32>
    %cst_33 = arith.constant 1.000000e+00 : f32
    %72 = vector.broadcast %cst_33 : f32 to vector<1x256xf32>
    %73 = arith.addf %72, %71 : vector<1x256xf32>
    %74 = math.log %73 : vector<1x256xf32>
    %75 = arith.addf %67, %74 : vector<1x256xf32>
    %76 = arith.mulf %75, %5 : vector<1x256xf32>
    %c0_34 = arith.constant 0 : index
    %c0_35 = arith.constant 0 : index
    %c0_36 = arith.constant 0 : index
    %77 = vector.load %arg8[%c0_34, %c0_35, %c0_36] : memref<1x1x256xf32, #tpu.memory_space<vmem>>, vector<1x1x256xf32>
    %78 = vector.shape_cast %77 : vector<1x1x256xf32> to vector<1x256xf32>
    %79 = vector.shape_cast %76 : vector<1x256xf32> to vector<1x1x256xf32>
    tpu.vector_store %arg8[%c0_34, %c0_35, %c0_36], %79 {strides = array<i32>} : memref<1x1x256xf32, #tpu.memory_space<vmem>>, vector<1x1x256xf32>,
    return
  }
  func.func @transform_0(%arg0: i32) -> (i32, i32, i32) {
    %c0_i32 = arith.constant 0 : i32
    %c0_i32_0 = arith.constant 0 : i32
    %c0_i32_1 = arith.constant 0 : i32
    return %arg0, %c0_i32, %c0_i32_0 : i32, i32, i32
  }
  func.func @transform_1(%arg0: i32) -> (i32, i32, i32) {
    %c0_i32 = arith.constant 0 : i32
    %c0_i32_0 = arith.constant 0 : i32
    %c0_i32_1 = arith.constant 0 : i32
    return %arg0, %c0_i32, %c0_i32_0 : i32, i32, i32
  }
  func.func @transform_2(%arg0: i32) -> (i32, i32, i32) {
    %c0_i32 = arith.constant 0 : i32
    %c0_i32_0 = arith.constant 0 : i32
    %c0_i32_1 = arith.constant 0 : i32
    return %arg0, %c0_i32, %c0_i32_0 : i32, i32, i32
  }
  func.func @transform_3(%arg0: i32) -> (i32, i32) {
    %c0_i32 = arith.constant 0 : i32
    %c0_i32_0 = arith.constant 0 : i32
    %c0_i32_1 = arith.constant 0 : i32
    return %c0_i32, %c0_i32_0 : i32, i32
  }
  func.func @transform_4(%arg0: i32) -> (i32, i32) {
    %c0_i32 = arith.constant 0 : i32
    %c0_i32_0 = arith.constant 0 : i32
    %c0_i32_1 = arith.constant 0 : i32
    return %c0_i32, %c0_i32_0 : i32, i32
  }
  func.func @transform_5(%arg0: i32) -> (i32, i32) {
    %c0_i32 = arith.constant 0 : i32
    %c0_i32_0 = arith.constant 0 : i32
    %c0_i32_1 = arith.constant 0 : i32
    return %c0_i32, %c0_i32_0 : i32, i32
  }
  func.func @transform_6(%arg0: i32) -> (i32, i32) {
    %c0_i32 = arith.constant 0 : i32
    %c0_i32_0 = arith.constant 0 : i32
    %c0_i32_1 = arith.constant 0 : i32
    return %c0_i32, %c0_i32_0 : i32, i32
  }
  func.func @transform_7(%arg0: i32) -> (i32, i32, i32) {
    %c0_i32 = arith.constant 0 : i32
    %c0_i32_0 = arith.constant 0 : i32
    %c0_i32_1 = arith.constant 0 : i32
    return %arg0, %c0_i32, %c0_i32_0 : i32, i32, i32
  }
}

</mosaic_0001>

<llo_original>
// kernel: tpu_custom_call.1
$region0: #{tpu_custom_call.1}
  #allocation0 [shape = 'u32[]', space=smem, size = 0x4, offset = 0x4, fixed_abs, tag = 'smem constant byte address 0x4 - core index']
  #allocation1 [shape = 'u32[144,128]{1,0:T(1,128)}', space=vmem, size = 0x12000, scoped, tag = 'internal scratch']
  %s0 = inlined_call_operand.hbm [shape: s32[1,1,256], index: 0, kind: input, shape index: {}]
  %s1 = inlined_call_operand.hbm [shape: f32[1,1,256], index: 1, kind: input, shape index: {}]
  %s2 = inlined_call_operand.hbm [shape: f32[1,1,256], index: 2, kind: input, shape index: {}]
  %s3 = inlined_call_operand.hbm [shape: bf16[32,256], index: 3, kind: input, shape index: {}]
  %s4 = inlined_call_operand.hbm [shape: bf16[256,32], index: 4, kind: input, shape index: {}]
  %s5 = inlined_call_operand.hbm [shape: bf16[32,256], index: 5, kind: input, shape index: {}]
  %s6 = inlined_call_operand.hbm [shape: f32[32,1], index: 6, kind: input, shape index: {}]
  %s7 = inlined_call_operand.hbm [shape: f32[1,1,256], index: 7, kind: output, shape index: {}]
  %s8 = sld [smem:[#allocation0]]
  $region66: #{tpu_custom_call.1} parent=0
    _
  %s10 = ssub.s32 1, %s8
  %s11 = scalar_select 0, %s10, %s8
  $region1: #{tpu_custom_call.1} parent=0
    #allocation2 [shape = 'u8[1024]{0}', space=vmem, size = 0x400, scoped, tag = 'input window, operand 0, single buffered']
    #allocation3 [shape = 's32[1]{0}', space=sflag, size = 0x4, scoped, tag = 'scoped memory for tpu_custom_call.1']
    #allocation4 [shape = 's32[1]{0}', space=sflag, size = 0x4, scoped, tag = 'scoped memory for tpu_custom_call.1']
    #allocation5 [shape = 'u8[1024]{0}', space=vmem, size = 0x400, scoped, tag = 'input window, operand 1, single buffered']
    #allocation6 [shape = 's32[1]{0}', space=sflag, size = 0x4, scoped, tag = 'scoped memory for tpu_custom_call.1']
    #allocation7 [shape = 'u8[1024]{0}', space=vmem, size = 0x400, scoped, tag = 'input window, operand 2, single buffered']
    #allocation8 [shape = 'u8[16384]{0}', space=vmem, size = 0x4000, scoped, tag = 'input window, operand 3, single buffered']
    #allocation9 [shape = 's32[1]{0}', space=sflag, size = 0x4, scoped, tag = 'scoped memory for tpu_custom_call.1']
    #allocation10 [shape = 'u8[65536]{0}', space=vmem, size = 0x10000, scoped, tag = 'input window, operand 4, single buffered']
    #allocation11 [shape = 'u8[16384]{0}', space=vmem, size = 0x4000, scoped, tag = 'input window, operand 5, single buffered']
    #allocation12 [shape = 's32[1]{0}', space=sflag, size = 0x4, scoped, tag = 'scoped memory for tpu_custom_call.1']
    #allocation13 [shape = 'u8[16384]{0}', space=vmem, size = 0x4000, scoped, tag = 'input window, operand 6, single buffered']
    #allocation14 [shape = 'u8[1024]{0}', space=vmem, size = 0x400, scoped, tag = 'output window, operand 0, single buffered']
    %12 = vsyncpa [#allocation3], 0
    %13 = vsyncpa [#allocation6], 0
    %14 = vsyncpa [#allocation9], 0
    %15 = vsyncpa [#allocation12], 0
    %16 = vsyncpa [#allocation4], 0
    // Predicated region
    $region2: #{tpu_custom_call.1} parent=1 // pred_check
      _
    $region3: #{tpu_custom_call.1} parent=1 // pred_check_branch
      %18 = sbr.rel (0) target = $region5
    $region4: #{tpu_custom_call.1} parent=1 // pred_region
      %s20 = ssub.s32 32, 32
      %21 = vsyncadd [#allocation3], %s20
      %s23 = sshll.u32 [#allocation2], 4
      %s24 = int_to_ptr.vmem [resolvable:$true] %s23
      %26 = dma.hbm_to_vmem [thread:$0]  %s0, 32, %s24, [#allocation3]
    $region5: #{tpu_custom_call.1} parent=1 // pred_fallthru
      _
    // Predicated region
    $region6: #{tpu_custom_call.1} parent=1 // pred_check
      _
    $region7: #{tpu_custom_call.1} parent=1 // pred_check_branch
      %28 = sbr.rel (0) target = $region9
    $region8: #{tpu_custom_call.1} parent=1 // pred_region
      %s30 = ssub.s32 32, 32
      %31 = vsyncadd [#allocation6], %s30
      %s33 = sshll.u32 [#allocation5], 4
      %s34 = int_to_ptr.vmem [resolvable:$true] %s33
      %36 = dma.hbm_to_vmem [thread:$0]  %s1, 32, %s34, [#allocation6]
    $region9: #{tpu_custom_call.1} parent=1 // pred_fallthru
      _
    // Predicated region
    $region10: #{tpu_custom_call.1} parent=1 // pred_check
      _
    $region11: #{tpu_custom_call.1} parent=1 // pred_check_branch
      %38 = sbr.rel (0) target = $region13
    $region12: #{tpu_custom_call.1} parent=1 // pred_region
      %s40 = ssub.s32 32, 32
      %41 = vsyncadd [#allocation6], %s40
      %s43 = sshll.u32 [#allocation7], 4
      %s44 = int_to_ptr.vmem [resolvable:$true] %s43
      %46 = dma.hbm_to_vmem [thread:$0]  %s2, 32, %s44, [#allocation6]
    $region13: #{tpu_custom_call.1} parent=1 // pred_fallthru
      _
    // Predicated region
    $region14: #{tpu_custom_call.1} parent=1 // pred_check
      _
    $region15: #{tpu_custom_call.1} parent=1 // pred_check_branch
      %48 = sbr.rel (0) target = $region17
    $region16: #{tpu_custom_call.1} parent=1 // pred_region
      %s50 = ssub.s32 512, 512
      %51 = vsyncadd [#allocation9], %s50
      %s52 = sshll.u32 [#allocation8], 4
      %s53 = int_to_ptr.vmem [resolvable:$true] %s52
      %58 = dma.hbm_to_vmem [thread:$0]  %s3, 512, %s53, [#allocation9], 128, 128, 8
    $region17: #{tpu_custom_call.1} parent=1 // pred_fallthru
      _
    // Predicated region
    $region18: #{tpu_custom_call.1} parent=1 // pred_check
      _
    $region19: #{tpu_custom_call.1} parent=1 // pred_check_branch
      %60 = sbr.rel (0) target = $region21
    $region20: #{tpu_custom_call.1} parent=1 // pred_region
      %s62 = ssub.s32 2048, 2048
      %63 = vsyncadd [#allocation9], %s62
      %s64 = sshll.u32 [#allocation10], 4
      %s65 = int_to_ptr.vmem [resolvable:$true] %s64
      %70 = dma.hbm_to_vmem [thread:$0]  %s4, 2048, %s65, [#allocation9], 64, 64, 4
    $region21: #{tpu_custom_call.1} parent=1 // pred_fallthru
      _
    // Predicated region
    $region22: #{tpu_custom_call.1} parent=1 // pred_check
      _
    $region23: #{tpu_custom_call.1} parent=1 // pred_check_branch
      %72 = sbr.rel (0) target = $region25
    $region24: #{tpu_custom_call.1} parent=1 // pred_region
      %s74 = ssub.s32 512, 512
      %75 = vsyncadd [#allocation12], %s74
      %s76 = sshll.u32 [#allocation11], 4
      %s77 = int_to_ptr.vmem [resolvable:$true] %s76
      %82 = dma.hbm_to_vmem [thread:$0]  %s5, 512, %s77, [#allocation12], 128, 128, 8
    $region25: #{tpu_custom_call.1} parent=1 // pred_fallthru
      _
    // Predicated region
    $region26: #{tpu_custom_call.1} parent=1 // pred_check
      _
    $region27: #{tpu_custom_call.1} parent=1 // pred_check_branch
      %84 = sbr.rel (0) target = $region29
    $region28: #{tpu_custom_call.1} parent=1 // pred_region
      %s86 = ssub.s32 512, 512
      %87 = vsyncadd [#allocation12], %s86
      %s88 = sshll.u32 [#allocation13], 4
      %s89 = int_to_ptr.vmem [resolvable:$true] %s88
      %94 = dma.hbm_to_vmem [thread:$0]  %s6, 512, %s89, [#allocation12], 128, 128, 8
    $region29: #{tpu_custom_call.1} parent=1 // pred_fallthru
      _
    // Predicated region
    $region30: #{tpu_custom_call.1} parent=1 // pred_check
      _
    $region31: #{tpu_custom_call.1} parent=1 // pred_check_branch
      %96 = sbr.rel (0) target = $region33
    $region32: #{tpu_custom_call.1} parent=1 // pred_region
      %97 = dma.done [#allocation3], 32
    $region33: #{tpu_custom_call.1} parent=1 // pred_fallthru
      _
    // Predicated region
    $region34: #{tpu_custom_call.1} parent=1 // pred_check
      _
    $region35: #{tpu_custom_call.1} parent=1 // pred_check_branch
      %99 = sbr.rel (0) target = $region37
    $region36: #{tpu_custom_call.1} parent=1 // pred_region
      %100 = dma.done [#allocation6], 32
    $region37: #{tpu_custom_call.1} parent=1 // pred_fallthru
      _
    // Predicated region
    $region38: #{tpu_custom_call.1} parent=1 // pred_check
      _
    $region39: #{tpu_custom_call.1} parent=1 // pred_check_branch
      %102 = sbr.rel (0) target = $region41
    $region40: #{tpu_custom_call.1} parent=1 // pred_region
      %103 = dma.done [#allocation6], 32
    $region41: #{tpu_custom_call.1} parent=1 // pred_fallthru
      _
    // Predicated region
    $region42: #{tpu_custom_call.1} parent=1 // pred_check
      _
    $region43: #{tpu_custom_call.1} parent=1 // pred_check_branch
      %105 = sbr.rel (0) target = $region45
    $region44: #{tpu_custom_call.1} parent=1 // pred_region
      %106 = dma.done [#allocation9], 512
    $region45: #{tpu_custom_call.1} parent=1 // pred_fallthru
      _
    // Predicated region
    $region46: #{tpu_custom_call.1} parent=1 // pred_check
      _
    $region47: #{tpu_custom_call.1} parent=1 // pred_check_branch
      %108 = sbr.rel (0) target = $region49
    $region48: #{tpu_custom_call.1} parent=1 // pred_region
      %109 = dma.done [#allocation9], 2048
    $region49: #{tpu_custom_call.1} parent=1 // pred_fallthru
      _
    // Predicated region
    $region50: #{tpu_custom_call.1} parent=1 // pred_check
      _
    $region51: #{tpu_custom_call.1} parent=1 // pred_check_branch
      %111 = sbr.rel (0) target = $region53
    $region52: #{tpu_custom_call.1} parent=1 // pred_region
      %112 = dma.done [#allocation12], 512
    $region53: #{tpu_custom_call.1} parent=1 // pred_fallthru
      _
    // Predicated region
    $region54: #{tpu_custom_call.1} parent=1 // pred_check
      _
    $region55: #{tpu_custom_call.1} parent=1 // pred_check_branch
      %114 = sbr.rel (0) target = $region57
    $region56: #{tpu_custom_call.1} parent=1 // pred_region
      %115 = dma.done [#allocation12], 512
    $region57: #{tpu_custom_call.1} parent=1 // pred_fallthru
      _
    %v117 = vld [vmem:[#allocation2] sm:$0x3]
    %v118 = vld [vmem:[#allocation5] sm:$0x3]
    %v119 = vld [vmem:[#allocation7] sm:$0x3]
    %vm120 = vcmp.gt.f32.partialorder %v118, 0.5
    %v121 = vsel %vm120, 16, %v117
    %v122 = vlaneseq
    %v123 = vshrl.u32 %v122, 7
    %v124 = vadd.s32 %v123, 8
    %v125 = vadd.s32 %v123, 16
    %v126 = vadd.s32 %v123, 24
    %v127 = vadd.s32 %v123, 32
    %v128 = vadd.s32 %v123, 40
    %v129 = vadd.s32 %v123, 48
    %v130 = vadd.s32 %v123, 56
    %v131 = vadd.s32 %v123, 64
    %v132 = vadd.s32 %v123, 72
    %v133 = vadd.s32 %v123, 80
    %v134 = vadd.s32 %v123, 88
    %v135 = vadd.s32 %v123, 96
    %v136 = vadd.s32 %v123, 104
    %v137 = vadd.s32 %v123, 112
    %v138 = vadd.s32 %v123, 120
    %v139 = vadd.s32 %v123, 128
    %v140 = vadd.s32 %v123, 136
    %v141 = vadd.s32 %v123, 144
    %v142 = vadd.s32 %v123, 152
    %v143 = vadd.s32 %v123, 160
    %v144 = vadd.s32 %v123, 168
    %v145 = vadd.s32 %v123, 176
    %v146 = vadd.s32 %v123, 184
    %v147 = vadd.s32 %v123, 192
    %v148 = vadd.s32 %v123, 200
    %v149 = vadd.s32 %v123, 208
    %v150 = vadd.s32 %v123, 216
    %v151 = vadd.s32 %v123, 224
    %v152 = vadd.s32 %v123, 232
    %v153 = vadd.s32 %v123, 240
    %v154 = vadd.s32 %v123, 248
    %v155 = vlaneseq
    %v156 = vshrl.u32 %v155, 7
    %v157 = vsub.s32 0, %v156
    %v158 = vrot.slane %v121, %v157
    %v159 = vlaneseq
    %v160 = vshrl.u32 %v159, 7
    %v161 = vsub.s32 1, %v160
    %v162 = vrot.slane %v121, %v161
    %vm163 = vcmp.eq.s32.totalorder %v123, %v158
    %vm164 = vcmp.eq.s32.totalorder %v123, %v162
    %vm165 = vcmp.eq.s32.totalorder %v124, %v158
    %vm166 = vcmp.eq.s32.totalorder %v124, %v162
    %vm167 = vcmp.eq.s32.totalorder %v125, %v158
    %vm168 = vcmp.eq.s32.totalorder %v125, %v162
    %vm169 = vcmp.eq.s32.totalorder %v126, %v158
    %vm170 = vcmp.eq.s32.totalorder %v126, %v162
    %vm171 = vcmp.eq.s32.totalorder %v127, %v158
    %vm172 = vcmp.eq.s32.totalorder %v127, %v162
    %vm173 = vcmp.eq.s32.totalorder %v128, %v158
    %vm174 = vcmp.eq.s32.totalorder %v128, %v162
    %vm175 = vcmp.eq.s32.totalorder %v129, %v158
    %vm176 = vcmp.eq.s32.totalorder %v129, %v162
    %vm177 = vcmp.eq.s32.totalorder %v130, %v158
    %vm178 = vcmp.eq.s32.totalorder %v130, %v162
    %vm179 = vcmp.eq.s32.totalorder %v131, %v158
    %vm180 = vcmp.eq.s32.totalorder %v131, %v162
    %vm181 = vcmp.eq.s32.totalorder %v132, %v158
    %vm182 = vcmp.eq.s32.totalorder %v132, %v162
    %vm183 = vcmp.eq.s32.totalorder %v133, %v158
    %vm184 = vcmp.eq.s32.totalorder %v133, %v162
    %vm185 = vcmp.eq.s32.totalorder %v134, %v158
    %vm186 = vcmp.eq.s32.totalorder %v134, %v162
    %vm187 = vcmp.eq.s32.totalorder %v135, %v158
    %vm188 = vcmp.eq.s32.totalorder %v135, %v162
    %vm189 = vcmp.eq.s32.totalorder %v136, %v158
    %vm190 = vcmp.eq.s32.totalorder %v136, %v162
    %vm191 = vcmp.eq.s32.totalorder %v137, %v158
    %vm192 = vcmp.eq.s32.totalorder %v137, %v162
    %vm193 = vcmp.eq.s32.totalorder %v138, %v158
    %vm194 = vcmp.eq.s32.totalorder %v138, %v162
    %vm195 = vcmp.eq.s32.totalorder %v139, %v158
    %vm196 = vcmp.eq.s32.totalorder %v139, %v162
    %vm197 = vcmp.eq.s32.totalorder %v140, %v158
    %vm198 = vcmp.eq.s32.totalorder %v140, %v162
    %vm199 = vcmp.eq.s32.totalorder %v141, %v158
    %vm200 = vcmp.eq.s32.totalorder %v141, %v162
    %vm201 = vcmp.eq.s32.totalorder %v142, %v158
    %vm202 = vcmp.eq.s32.totalorder %v142, %v162
    %vm203 = vcmp.eq.s32.totalorder %v143, %v158
    %vm204 = vcmp.eq.s32.totalorder %v143, %v162
    %vm205 = vcmp.eq.s32.totalorder %v144, %v158
    %vm206 = vcmp.eq.s32.totalorder %v144, %v162
    %vm207 = vcmp.eq.s32.totalorder %v145, %v158
    %vm208 = vcmp.eq.s32.totalorder %v145, %v162
    %vm209 = vcmp.eq.s32.totalorder %v146, %v158
    %vm210 = vcmp.eq.s32.totalorder %v146, %v162
    %vm211 = vcmp.eq.s32.totalorder %v147, %v158
    %vm212 = vcmp.eq.s32.totalorder %v147, %v162
    %vm213 = vcmp.eq.s32.totalorder %v148, %v158
    %vm214 = vcmp.eq.s32.totalorder %v148, %v162
    %vm215 = vcmp.eq.s32.totalorder %v149, %v158
    %vm216 = vcmp.eq.s32.totalorder %v149, %v162
    %vm217 = vcmp.eq.s32.totalorder %v150, %v158
    %vm218 = vcmp.eq.s32.totalorder %v150, %v162
    %vm219 = vcmp.eq.s32.totalorder %v151, %v158
    %vm220 = vcmp.eq.s32.totalorder %v151, %v162
    %vm221 = vcmp.eq.s32.totalorder %v152, %v158
    %vm222 = vcmp.eq.s32.totalorder %v152, %v162
    %vm223 = vcmp.eq.s32.totalorder %v153, %v158
    %vm224 = vcmp.eq.s32.totalorder %v153, %v162
    %vm225 = vcmp.eq.s32.totalorder %v154, %v158
    %vm226 = vcmp.eq.s32.totalorder %v154, %v162
    %v227 = vsel %vm163, 1, 0
    %v228 = vsel %vm164, 1, 0
    %v229 = vsel %vm165, 1, 0
    %v230 = vsel %vm166, 1, 0
    %v231 = vsel %vm167, 1, 0
    %v232 = vsel %vm168, 1, 0
    %v233 = vsel %vm169, 1, 0
    %v234 = vsel %vm170, 1, 0
    %v235 = vsel %vm171, 1, 0
    %v236 = vsel %vm172, 1, 0
    %v237 = vsel %vm173, 1, 0
    %v238 = vsel %vm174, 1, 0
    %v239 = vsel %vm175, 1, 0
    %v240 = vsel %vm176, 1, 0
    %v241 = vsel %vm177, 1, 0
    %v242 = vsel %vm178, 1, 0
    %v243 = vsel %vm179, 1, 0
    %v244 = vsel %vm180, 1, 0
    %v245 = vsel %vm181, 1, 0
    %v246 = vsel %vm182, 1, 0
    %v247 = vsel %vm183, 1, 0
    %v248 = vsel %vm184, 1, 0
    %v249 = vsel %vm185, 1, 0
    %v250 = vsel %vm186, 1, 0
    %v251 = vsel %vm187, 1, 0
    %v252 = vsel %vm188, 1, 0
    %v253 = vsel %vm189, 1, 0
    %v254 = vsel %vm190, 1, 0
    %v255 = vsel %vm191, 1, 0
    %v256 = vsel %vm192, 1, 0
    %v257 = vsel %vm193, 1, 0
    %v258 = vsel %vm194, 1, 0
    %v259 = vsel %vm195, 1, 0
    %v260 = vsel %vm196, 1, 0
    %v261 = vsel %vm197, 1, 0
    %v262 = vsel %vm198, 1, 0
    %v263 = vsel %vm199, 1, 0
    %v264 = vsel %vm200, 1, 0
    %v265 = vsel %vm201, 1, 0
    %v266 = vsel %vm202, 1, 0
    %v267 = vsel %vm203, 1, 0
    %v268 = vsel %vm204, 1, 0
    %v269 = vsel %vm205, 1, 0
    %v270 = vsel %vm206, 1, 0
    %v271 = vsel %vm207, 1, 0
    %v272 = vsel %vm208, 1, 0
    %v273 = vsel %vm209, 1, 0
    %v274 = vsel %vm210, 1, 0
    %v275 = vsel %vm211, 1, 0
    %v276 = vsel %vm212, 1, 0
    %v277 = vsel %vm213, 1, 0
    %v278 = vsel %vm214, 1, 0
    %v279 = vsel %vm215, 1, 0
    %v280 = vsel %vm216, 1, 0
    %v281 = vsel %vm217, 1, 0
    %v282 = vsel %vm218, 1, 0
    %v283 = vsel %vm219, 1, 0
    %v284 = vsel %vm220, 1, 0
    %v285 = vsel %vm221, 1, 0
    %v286 = vsel %vm222, 1, 0
    %v287 = vsel %vm223, 1, 0
    %v288 = vsel %vm224, 1, 0
    %v289 = vsel %vm225, 1, 0
    %v290 = vsel %vm226, 1, 0
    %v291 = vcvt.s32.f32 %v227
    %v292 = vcvt.s32.f32 %v228
    %v293 = vcvt.s32.f32 %v229
    %v294 = vcvt.s32.f32 %v230
    %v295 = vcvt.s32.f32 %v231
    %v296 = vcvt.s32.f32 %v232
    %v297 = vcvt.s32.f32 %v233
    %v298 = vcvt.s32.f32 %v234
    %v299 = vcvt.s32.f32 %v235
    %v300 = vcvt.s32.f32 %v236
    %v301 = vcvt.s32.f32 %v237
    %v302 = vcvt.s32.f32 %v238
    %v303 = vcvt.s32.f32 %v239
    %v304 = vcvt.s32.f32 %v240
    %v305 = vcvt.s32.f32 %v241
    %v306 = vcvt.s32.f32 %v242
    %v307 = vcvt.s32.f32 %v243
    %v308 = vcvt.s32.f32 %v244
    %v309 = vcvt.s32.f32 %v245
    %v310 = vcvt.s32.f32 %v246
    %v311 = vcvt.s32.f32 %v247
    %v312 = vcvt.s32.f32 %v248
    %v313 = vcvt.s32.f32 %v249
    %v314 = vcvt.s32.f32 %v250
    %v315 = vcvt.s32.f32 %v251
    %v316 = vcvt.s32.f32 %v252
    %v317 = vcvt.s32.f32 %v253
    %v318 = vcvt.s32.f32 %v254
    %v319 = vcvt.s32.f32 %v255
    %v320 = vcvt.s32.f32 %v256
    %v321 = vcvt.s32.f32 %v257
    %v322 = vcvt.s32.f32 %v258
    %v323 = vcvt.s32.f32 %v259
    %v324 = vcvt.s32.f32 %v260
    %v325 = vcvt.s32.f32 %v261
    %v326 = vcvt.s32.f32 %v262
    %v327 = vcvt.s32.f32 %v263
    %v328 = vcvt.s32.f32 %v264
    %v329 = vcvt.s32.f32 %v265
    %v330 = vcvt.s32.f32 %v266
    %v331 = vcvt.s32.f32 %v267
    %v332 = vcvt.s32.f32 %v268
    %v333 = vcvt.s32.f32 %v269
    %v334 = vcvt.s32.f32 %v270
    %v335 = vcvt.s32.f32 %v271
    %v336 = vcvt.s32.f32 %v272
    %v337 = vcvt.s32.f32 %v273
    %v338 = vcvt.s32.f32 %v274
    %v339 = vcvt.s32.f32 %v275
    %v340 = vcvt.s32.f32 %v276
    %v341 = vcvt.s32.f32 %v277
    %v342 = vcvt.s32.f32 %v278
    %v343 = vcvt.s32.f32 %v279
    %v344 = vcvt.s32.f32 %v280
    %v345 = vcvt.s32.f32 %v281
    %v346 = vcvt.s32.f32 %v282
    %v347 = vcvt.s32.f32 %v283
    %v348 = vcvt.s32.f32 %v284
    %v349 = vcvt.s32.f32 %v285
    %v350 = vcvt.s32.f32 %v286
    %v351 = vcvt.s32.f32 %v287
    %v352 = vcvt.s32.f32 %v288
    %v353 = vcvt.s32.f32 %v289
    %v354 = vcvt.s32.f32 %v290
    %v355 = vpack.c.bf16 %v293, %v291
    %v356 = vpack.c.bf16 %v294, %v292
    %v357 = vpack.c.bf16 %v297, %v295
    %v358 = vpack.c.bf16 %v298, %v296
    %v359 = vpack.c.bf16 %v301, %v299
    %v360 = vpack.c.bf16 %v302, %v300
    %v361 = vpack.c.bf16 %v305, %v303
    %v362 = vpack.c.bf16 %v306, %v304
    %v363 = vpack.c.bf16 %v309, %v307
    %v364 = vpack.c.bf16 %v310, %v308
    %v365 = vpack.c.bf16 %v313, %v311
    %v366 = vpack.c.bf16 %v314, %v312
    %v367 = vpack.c.bf16 %v317, %v315
    %v368 = vpack.c.bf16 %v318, %v316
    %v369 = vpack.c.bf16 %v321, %v319
    %v370 = vpack.c.bf16 %v322, %v320
    %v371 = vpack.c.bf16 %v325, %v323
    %v372 = vpack.c.bf16 %v326, %v324
    %v373 = vpack.c.bf16 %v329, %v327
    %v374 = vpack.c.bf16 %v330, %v328
    %v375 = vpack.c.bf16 %v333, %v331
    %v376 = vpack.c.bf16 %v334, %v332
    %v377 = vpack.c.bf16 %v337, %v335
    %v378 = vpack.c.bf16 %v338, %v336
    %v379 = vpack.c.bf16 %v341, %v339
    %v380 = vpack.c.bf16 %v342, %v340
    %v381 = vpack.c.bf16 %v345, %v343
    %v382 = vpack.c.bf16 %v346, %v344
    %v383 = vpack.c.bf16 %v349, %v347
    %v384 = vpack.c.bf16 %v350, %v348
    %v385 = vpack.c.bf16 %v353, %v351
    %v386 = vpack.c.bf16 %v354, %v352
    %v387 = vld [vmem:[#allocation8] sm:$0xff]
    %v388 = vld [vmem:[#allocation8 + $0x8] sm:$0xff]
    %v389 = vld [vmem:[#allocation8 + $0x10] sm:$0xff]
    %v390 = vld [vmem:[#allocation8 + $0x18] sm:$0xff]
    %v395 = vunpack.c.l.b16 %v387
    %v396 = vunpack.c.h.b16 %v387
    %v397 = vunpack.c.l.b16 %v388
    %v398 = vunpack.c.h.b16 %v388
    %v399 = vunpack.c.l.b16 %v389
    %v400 = vunpack.c.h.b16 %v389
    %v401 = vunpack.c.l.b16 %v390
    %v402 = vunpack.c.h.b16 %v390
    %v403 = vpack.c.b16 %v397, %v395
    %v404 = vpack.c.b16 %v398, %v396
    %v405 = vpack.c.b16 %v401, %v399
    %v406 = vpack.c.b16 %v402, %v400
    %411 = vmatprep.subr.bf16.mxu0 %v356
    %412 = vmatpush1.bf16.msra.mxu0 %v355
    %413 = vmatprep.subr.bf16.mxu0 %v358
    %414 = vmatpush1.bf16.msra.mxu0 %v357
    %415 = vmatprep.subr.bf16.mxu0 %v360
    %416 = vmatpush1.bf16.msra.mxu0 %v359
    %417 = vmatprep.subr.bf16.mxu0 %v362
    %418 = vmatpush1.bf16.msra.mxu0 %v361
    %419 = vmatprep.subr.bf16.mxu0 %v364
    %420 = vmatpush1.bf16.msra.mxu0 %v363
    %421 = vmatprep.subr.bf16.mxu0 %v366
    %422 = vmatpush1.bf16.msra.mxu0 %v365
    %423 = vmatprep.subr.bf16.mxu0 %v368
    %424 = vmatpush1.bf16.msra.mxu0 %v367
    %425 = vmatprep.subr.bf16.mxu0 %v370
    %426 = vmatpush1.bf16.msra.mxu0 %v369
    %427 = vmatprep.subr.bf16.mxu0 %v372
    %428 = vmatpush1.bf16.msra.mxu0 %v371
    %429 = vmatprep.subr.bf16.mxu0 %v374
    %430 = vmatpush1.bf16.msra.mxu0 %v373
    %431 = vmatprep.subr.bf16.mxu0 %v376
    %432 = vmatpush1.bf16.msra.mxu0 %v375
    %433 = vmatprep.subr.bf16.mxu0 %v378
    %434 = vmatpush1.bf16.msra.mxu0 %v377
    %435 = vmatprep.subr.bf16.mxu0 %v380
    %436 = vmatpush1.bf16.msra.mxu0 %v379
    %437 = vmatprep.subr.bf16.mxu0 %v382
    %438 = vmatpush1.bf16.msra.mxu0 %v381
    %439 = vmatprep.subr.bf16.mxu0 %v384
    %440 = vmatpush1.bf16.msra.mxu0 %v383
    %441 = vmatprep.subr.bf16.mxu0 %v386
    %442 = vmatpush1.bf16.msra.mxu0 %v385
    %443 = vmatprep.mubr.bf16.mxu0 %v404
    %444 = vmatmul.mubr.bf16.gmra.mrb[0].mxu0 %v403
    %v445 = vpop.f32.mrb[0].mxu0
    %v446 = vadd.f32 0.0, %v445
    %v447 = vpop.f32.mrb[0].mxu0
    %v448 = vadd.f32 0.0, %v447
    %v449 = vpop.f32.mrb[0].mxu0
    %v450 = vadd.f32 0.0, %v449
    %v451 = vpop.f32.mrb[0].mxu0
    %v452 = vadd.f32 0.0, %v451
    %453 = vmatprep.mubr.bf16.mxu0 %v406
    %454 = vmatmul.mubr.bf16.gmra.mrb[0].mxu0 %v405
    %v455 = vpop.f32.mrb[0].mxu0
    %v456 = vadd.f32 0.0, %v455
    %v457 = vpop.f32.mrb[0].mxu0
    %v458 = vadd.f32 0.0, %v457
    %v459 = vpop.f32.mrb[0].mxu0
    %v460 = vadd.f32 0.0, %v459
    %v461 = vpop.f32.mrb[0].mxu0
    %v462 = vadd.f32 0.0, %v461
    %463 = vdwg.mxu0
    %v464 = vtanh.pop %v446
    %v465 = vtanh.pop %v448
    %v466 = vtanh.pop %v450
    %v467 = vtanh.pop %v452
    %v468 = vtanh.pop %v456
    %v469 = vtanh.pop %v458
    %v470 = vtanh.pop %v460
    %v471 = vtanh.pop %v462
    %v472 = vpack.c.bf16 %v466, %v464
    %v473 = vpack.c.bf16 %v467, %v465
    %v474 = vpack.c.bf16 %v470, %v468
    %v475 = vpack.c.bf16 %v471, %v469
    %v476 = vld [vmem:[#allocation10] sm:$0xf]
    %v477 = vld [vmem:[#allocation10 + $0x4] sm:$0xf]
    %v478 = vld [vmem:[#allocation10 + $0x8] sm:$0xf]
    %v479 = vld [vmem:[#allocation10 + $0xc] sm:$0xf]
    %v480 = vld [vmem:[#allocation10 + $0x10] sm:$0xf]
    %v481 = vld [vmem:[#allocation10 + $0x14] sm:$0xf]
    %v482 = vld [vmem:[#allocation10 + $0x18] sm:$0xf]
    %v483 = vld [vmem:[#allocation10 + $0x1c] sm:$0xf]
    %v484 = vld [vmem:[#allocation10 + $0x20] sm:$0xf]
    %v485 = vld [vmem:[#allocation10 + $0x24] sm:$0xf]
    %v486 = vld [vmem:[#allocation10 + $0x28] sm:$0xf]
    %v487 = vld [vmem:[#allocation10 + $0x2c] sm:$0xf]
    %v488 = vld [vmem:[#allocation10 + $0x30] sm:$0xf]
    %v489 = vld [vmem:[#allocation10 + $0x34] sm:$0xf]
    %v490 = vld [vmem:[#allocation10 + $0x38] sm:$0xf]
    %v491 = vld [vmem:[#allocation10 + $0x3c] sm:$0xf]
    %v492 = vld [vmem:[#allocation10 + $0x40] sm:$0xf]
    %v493 = vld [vmem:[#allocation10 + $0x44] sm:$0xf]
    %v494 = vld [vmem:[#allocation10 + $0x48] sm:$0xf]
    %v495 = vld [vmem:[#allocation10 + $0x4c] sm:$0xf]
    %v496 = vld [vmem:[#allocation10 + $0x50] sm:$0xf]
    %v497 = vld [vmem:[#allocation10 + $0x54] sm:$0xf]
    %v498 = vld [vmem:[#allocation10 + $0x58] sm:$0xf]
    %v499 = vld [vmem:[#allocation10 + $0x5c] sm:$0xf]
    %v500 = vld [vmem:[#allocation10 + $0x60] sm:$0xf]
    %v501 = vld [vmem:[#allocation10 + $0x64] sm:$0xf]
    %v502 = vld [vmem:[#allocation10 + $0x68] sm:$0xf]
    %v503 = vld [vmem:[#allocation10 + $0x6c] sm:$0xf]
    %v504 = vld [vmem:[#allocation10 + $0x70] sm:$0xf]
    %v505 = vld [vmem:[#allocation10 + $0x74] sm:$0xf]
    %v506 = vld [vmem:[#allocation10 + $0x78] sm:$0xf]
    %v507 = vld [vmem:[#allocation10 + $0x7c] sm:$0xf]
    %v540 = vunpack.c.l.b16 %v476
    %v541 = vunpack.c.l.b16 %v477
    %v542 = vunpack.c.l.b16 %v478
    %v543 = vunpack.c.l.b16 %v479
    %v544 = vunpack.c.l.b16 %v480
    %v545 = vunpack.c.l.b16 %v481
    %v546 = vunpack.c.l.b16 %v482
    %v547 = vunpack.c.l.b16 %v483
    %v548 = vunpack.c.l.b16 %v484
    %v549 = vunpack.c.l.b16 %v485
    %v550 = vunpack.c.l.b16 %v486
    %v551 = vunpack.c.l.b16 %v487
    %v552 = vunpack.c.l.b16 %v488
    %v553 = vunpack.c.l.b16 %v489
    %v554 = vunpack.c.l.b16 %v490
    %v555 = vunpack.c.l.b16 %v491
    %v556 = vunpack.c.l.b16 %v492
    %v557 = vunpack.c.l.b16 %v493
    %v558 = vunpack.c.l.b16 %v494
    %v559 = vunpack.c.l.b16 %v495
    %v560 = vunpack.c.l.b16 %v496
    %v561 = vunpack.c.l.b16 %v497
    %v562 = vunpack.c.l.b16 %v498
    %v563 = vunpack.c.l.b16 %v499
    %v564 = vunpack.c.l.b16 %v500
    %v565 = vunpack.c.l.b16 %v501
    %v566 = vunpack.c.l.b16 %v502
    %v567 = vunpack.c.l.b16 %v503
    %v568 = vunpack.c.l.b16 %v504
    %v569 = vunpack.c.l.b16 %v505
    %v570 = vunpack.c.l.b16 %v506
    %v571 = vunpack.c.l.b16 %v507
    %v572 = vpack.c.b16 %v541, %v540
    %v573 = vpack.c.b16 %v543, %v542
    %v574 = vpack.c.b16 %v545, %v544
    %v575 = vpack.c.b16 %v547, %v546
    %v576 = vpack.c.b16 %v549, %v548
    %v577 = vpack.c.b16 %v551, %v550
    %v578 = vpack.c.b16 %v553, %v552
    %v579 = vpack.c.b16 %v555, %v554
    %v580 = vpack.c.b16 %v557, %v556
    %v581 = vpack.c.b16 %v559, %v558
    %v582 = vpack.c.b16 %v561, %v560
    %v583 = vpack.c.b16 %v563, %v562
    %v584 = vpack.c.b16 %v565, %v564
    %v585 = vpack.c.b16 %v567, %v566
    %v586 = vpack.c.b16 %v569, %v568
    %v587 = vpack.c.b16 %v571, %v570
    %vm588 = vcmask 261120
    %v590 = vsel %vm588, %v572, 0
    %v593 = vsel %vm588, %v573, 0
    %v596 = vsel %vm588, %v574, 0
    %v599 = vsel %vm588, %v575, 0
    %v602 = vsel %vm588, %v576, 0
    %v605 = vsel %vm588, %v577, 0
    %v608 = vsel %vm588, %v578, 0
    %v611 = vsel %vm588, %v579, 0
    %v614 = vsel %vm588, %v580, 0
    %v617 = vsel %vm588, %v581, 0
    %v620 = vsel %vm588, %v582, 0
    %v623 = vsel %vm588, %v583, 0
    %v626 = vsel %vm588, %v584, 0
    %v629 = vsel %vm588, %v585, 0
    %v632 = vsel %vm588, %v586, 0
    %v635 = vsel %vm588, %v587, 0
    %637 = vmatprep.subr.bf16.mxu0 %v473
    %638 = vmatpush1.bf16.msra.mxu0 %v472
    %639 = vmatprep.subr.bf16.mxu0 %v475
    %640 = vmatpush1.bf16.msra.mxu0 %v474
    %641 = vmatprep.subr.bf16.mxu0 0
    %642 = vmatpush1.bf16.msra.mxu0 0
    %643 = vmatprep.subr.bf16.mxu0 0
    %644 = vmatpush1.bf16.msra.mxu0 0
    %645 = vmatprep.subr.bf16.mxu0 0
    %646 = vmatpush1.bf16.msra.mxu0 0
    %647 = vmatprep.subr.bf16.mxu0 0
    %648 = vmatpush1.bf16.msra.mxu0 0
    %649 = vmatprep.subr.bf16.mxu0 0
    %650 = vmatpush1.bf16.msra.mxu0 0
    %651 = vmatprep.subr.bf16.mxu0 0
    %652 = vmatpush1.bf16.msra.mxu0 0
    %653 = vmatprep.subr.bf16.mxu0 0
    %654 = vmatpush1.bf16.msra.mxu0 0
    %655 = vmatprep.subr.bf16.mxu0 0
    %656 = vmatpush1.bf16.msra.mxu0 0
    %657 = vmatprep.subr.bf16.mxu0 0
    %658 = vmatpush1.bf16.msra.mxu0 0
    %659 = vmatprep.subr.bf16.mxu0 0
    %660 = vmatpush1.bf16.msra.mxu0 0
    %661 = vmatprep.subr.bf16.mxu0 0
    %662 = vmatpush1.bf16.msra.mxu0 0
    %663 = vmatprep.subr.bf16.mxu0 0
    %664 = vmatpush1.bf16.msra.mxu0 0
    %665 = vmatprep.subr.bf16.mxu0 0
    %666 = vmatpush1.bf16.msra.mxu0 0
    %667 = vmatprep.subr.bf16.mxu0 0
    %668 = vmatpush1.bf16.msra.mxu0 0
    %669 = vmatprep.mubr.bf16.mxu0 0
    %670 = vmatmul.mubr.bf16.gmra.mrb[0].mxu0 %v590
    %v671 = vpop.f32.mrb[0].mxu0
    %v672 = vadd.f32 0.0, %v671
    %v673 = vpop.f32.mrb[0].mxu0
    %v674 = vadd.f32 0.0, %v673
    %v675 = vpop.f32.mrb[0].mxu0
    %v676 = vadd.f32 0.0, %v675
    %v677 = vpop.f32.mrb[0].mxu0
    %v678 = vadd.f32 0.0, %v677
    %679 = vmatprep.mubr.bf16.mxu0 0
    %680 = vmatmul.mubr.bf16.gmra.mrb[0].mxu0 %v593
    %v681 = vpop.f32.mrb[0].mxu0
    %v682 = vadd.f32 0.0, %v681
    %v683 = vpop.f32.mrb[0].mxu0
    %v684 = vadd.f32 0.0, %v683
    %v685 = vpop.f32.mrb[0].mxu0
    %v686 = vadd.f32 0.0, %v685
    %v687 = vpop.f32.mrb[0].mxu0
    %v688 = vadd.f32 0.0, %v687
    %689 = vmatprep.mubr.bf16.mxu0 0
    %690 = vmatmul.mubr.bf16.gmra.mrb[0].mxu0 %v596
    %v691 = vpop.f32.mrb[0].mxu0
    %v692 = vadd.f32 0.0, %v691
    %v693 = vpop.f32.mrb[0].mxu0
    %v694 = vadd.f32 0.0, %v693
    %v695 = vpop.f32.mrb[0].mxu0
    %v696 = vadd.f32 0.0, %v695
    %v697 = vpop.f32.mrb[0].mxu0
    %v698 = vadd.f32 0.0, %v697
    %699 = vmatprep.mubr.bf16.mxu0 0
    %700 = vmatmul.mubr.bf16.gmra.mrb[0].mxu0 %v599
    %v701 = vpop.f32.mrb[0].mxu0
    %v702 = vadd.f32 0.0, %v701
    %v703 = vpop.f32.mrb[0].mxu0
    %v704 = vadd.f32 0.0, %v703
    %v705 = vpop.f32.mrb[0].mxu0
    %v706 = vadd.f32 0.0, %v705
    %v707 = vpop.f32.mrb[0].mxu0
    %v708 = vadd.f32 0.0, %v707
    %709 = vmatprep.mubr.bf16.mxu0 0
    %710 = vmatmul.mubr.bf16.gmra.mrb[0].mxu0 %v602
    %v711 = vpop.f32.mrb[0].mxu0
    %v712 = vadd.f32 0.0, %v711
    %v713 = vpop.f32.mrb[0].mxu0
    %v714 = vadd.f32 0.0, %v713
    %v715 = vpop.f32.mrb[0].mxu0
    %v716 = vadd.f32 0.0, %v715
    %v717 = vpop.f32.mrb[0].mxu0
    %v718 = vadd.f32 0.0, %v717
    %719 = vmatprep.mubr.bf16.mxu0 0
    %720 = vmatmul.mubr.bf16.gmra.mrb[0].mxu0 %v605
    %v721 = vpop.f32.mrb[0].mxu0
    %v722 = vadd.f32 0.0, %v721
    %v723 = vpop.f32.mrb[0].mxu0
    %v724 = vadd.f32 0.0, %v723
    %v725 = vpop.f32.mrb[0].mxu0
    %v726 = vadd.f32 0.0, %v725
    %v727 = vpop.f32.mrb[0].mxu0
    %v728 = vadd.f32 0.0, %v727
    %729 = vmatprep.mubr.bf16.mxu0 0
    %730 = vmatmul.mubr.bf16.gmra.mrb[0].mxu0 %v608
    %v731 = vpop.f32.mrb[0].mxu0
    %v732 = vadd.f32 0.0, %v731
    %v733 = vpop.f32.mrb[0].mxu0
    %v734 = vadd.f32 0.0, %v733
    %v735 = vpop.f32.mrb[0].mxu0
    %v736 = vadd.f32 0.0, %v735
    %v737 = vpop.f32.mrb[0].mxu0
    %v738 = vadd.f32 0.0, %v737
    %739 = vmatprep.mubr.bf16.mxu0 0
    %740 = vmatmul.mubr.bf16.gmra.mrb[0].mxu0 %v611
    %v741 = vpop.f32.mrb[0].mxu0
    %v742 = vadd.f32 0.0, %v741
    %v743 = vpop.f32.mrb[0].mxu0
    %v744 = vadd.f32 0.0, %v743
    %v745 = vpop.f32.mrb[0].mxu0
    %v746 = vadd.f32 0.0, %v745
    %v747 = vpop.f32.mrb[0].mxu0
    %v748 = vadd.f32 0.0, %v747
    %749 = vmatprep.mubr.bf16.mxu0 0
    %750 = vmatmul.mubr.bf16.gmra.mrb[0].mxu0 %v614
    %v751 = vpop.f32.mrb[0].mxu0
    %v752 = vadd.f32 0.0, %v751
    %v753 = vpop.f32.mrb[0].mxu0
    %v754 = vadd.f32 0.0, %v753
    %v755 = vpop.f32.mrb[0].mxu0
    %v756 = vadd.f32 0.0, %v755
    %v757 = vpop.f32.mrb[0].mxu0
    %v758 = vadd.f32 0.0, %v757
    %759 = vmatprep.mubr.bf16.mxu0 0
    %760 = vmatmul.mubr.bf16.gmra.mrb[0].mxu0 %v617
    %v761 = vpop.f32.mrb[0].mxu0
    %v762 = vadd.f32 0.0, %v761
    %v763 = vpop.f32.mrb[0].mxu0
    %v764 = vadd.f32 0.0, %v763
    %v765 = vpop.f32.mrb[0].mxu0
    %v766 = vadd.f32 0.0, %v765
    %v767 = vpop.f32.mrb[0].mxu0
    %v768 = vadd.f32 0.0, %v767
    %769 = vmatprep.mubr.bf16.mxu0 0
    %770 = vmatmul.mubr.bf16.gmra.mrb[0].mxu0 %v620
    %v771 = vpop.f32.mrb[0].mxu0
    %v772 = vadd.f32 0.0, %v771
    %v773 = vpop.f32.mrb[0].mxu0
    %v774 = vadd.f32 0.0, %v773
    %v775 = vpop.f32.mrb[0].mxu0
    %v776 = vadd.f32 0.0, %v775
    %v777 = vpop.f32.mrb[0].mxu0
    %v778 = vadd.f32 0.0, %v777
    %779 = vmatprep.mubr.bf16.mxu0 0
    %780 = vmatmul.mubr.bf16.gmra.mrb[0].mxu0 %v623
    %v781 = vpop.f32.mrb[0].mxu0
    %v782 = vadd.f32 0.0, %v781
    %v783 = vpop.f32.mrb[0].mxu0
    %v784 = vadd.f32 0.0, %v783
    %v785 = vpop.f32.mrb[0].mxu0
    %v786 = vadd.f32 0.0, %v785
    %v787 = vpop.f32.mrb[0].mxu0
    %v788 = vadd.f32 0.0, %v787
    %789 = vmatprep.mubr.bf16.mxu0 0
    %790 = vmatmul.mubr.bf16.gmra.mrb[0].mxu0 %v626
    %v791 = vpop.f32.mrb[0].mxu0
    %v792 = vadd.f32 0.0, %v791
    %v793 = vpop.f32.mrb[0].mxu0
    %v794 = vadd.f32 0.0, %v793
    %v795 = vpop.f32.mrb[0].mxu0
    %v796 = vadd.f32 0.0, %v795
    %v797 = vpop.f32.mrb[0].mxu0
    %v798 = vadd.f32 0.0, %v797
    %799 = vmatprep.mubr.bf16.mxu0 0
    %800 = vmatmul.mubr.bf16.gmra.mrb[0].mxu0 %v629
    %v801 = vpop.f32.mrb[0].mxu0
    %v802 = vadd.f32 0.0, %v801
    %v803 = vpop.f32.mrb[0].mxu0
    %v804 = vadd.f32 0.0, %v803
    %v805 = vpop.f32.mrb[0].mxu0
    %v806 = vadd.f32 0.0, %v805
    %v807 = vpop.f32.mrb[0].mxu0
    %v808 = vadd.f32 0.0, %v807
    %809 = vmatprep.mubr.bf16.mxu0 0
    %810 = vmatmul.mubr.bf16.gmra.mrb[0].mxu0 %v632
    %v811 = vpop.f32.mrb[0].mxu0
    %v812 = vadd.f32 0.0, %v811
    %v813 = vpop.f32.mrb[0].mxu0
    %v814 = vadd.f32 0.0, %v813
    %v815 = vpop.f32.mrb[0].mxu0
    %v816 = vadd.f32 0.0, %v815
    %v817 = vpop.f32.mrb[0].mxu0
    %v818 = vadd.f32 0.0, %v817
    %819 = vmatprep.mubr.bf16.mxu0 0
    %820 = vmatmul.mubr.bf16.gmra.mrb[0].mxu0 %v635
    %v821 = vpop.f32.mrb[0].mxu0
    %v822 = vadd.f32 0.0, %v821
    %v823 = vpop.f32.mrb[0].mxu0
    %v824 = vadd.f32 0.0, %v823
    %v825 = vpop.f32.mrb[0].mxu0
    %v826 = vadd.f32 0.0, %v825
    %v827 = vpop.f32.mrb[0].mxu0
    %v828 = vadd.f32 0.0, %v827
    %829 = vdwg.mxu0
    %vm830 = vcmp.lt.s32.totalorder %v123, 16
    %vm831 = vcmp.lt.s32.totalorder %v124, 16
    %vm832 = vcmp.lt.s32.totalorder %v125, 16
    %vm833 = vcmp.lt.s32.totalorder %v126, 16
    %vm834 = vcmp.lt.s32.totalorder %v127, 16
    %vm835 = vcmp.lt.s32.totalorder %v128, 16
    %vm836 = vcmp.lt.s32.totalorder %v129, 16
    %vm837 = vcmp.lt.s32.totalorder %v130, 16
    %vm838 = vcmp.lt.s32.totalorder %v131, 16
    %vm839 = vcmp.lt.s32.totalorder %v132, 16
    %vm840 = vcmp.lt.s32.totalorder %v133, 16
    %vm841 = vcmp.lt.s32.totalorder %v134, 16
    %vm842 = vcmp.lt.s32.totalorder %v135, 16
    %vm843 = vcmp.lt.s32.totalorder %v136, 16
    %vm844 = vcmp.lt.s32.totalorder %v137, 16
    %vm845 = vcmp.lt.s32.totalorder %v138, 16
    %vm846 = vcmp.lt.s32.totalorder %v139, 16
    %vm847 = vcmp.lt.s32.totalorder %v140, 16
    %vm848 = vcmp.lt.s32.totalorder %v141, 16
    %vm849 = vcmp.lt.s32.totalorder %v142, 16
    %vm850 = vcmp.lt.s32.totalorder %v143, 16
    %vm851 = vcmp.lt.s32.totalorder %v144, 16
    %vm852 = vcmp.lt.s32.totalorder %v145, 16
    %vm853 = vcmp.lt.s32.totalorder %v146, 16
    %vm854 = vcmp.lt.s32.totalorder %v147, 16
    %vm855 = vcmp.lt.s32.totalorder %v148, 16
    %vm856 = vcmp.lt.s32.totalorder %v149, 16
    %vm857 = vcmp.lt.s32.totalorder %v150, 16
    %vm858 = vcmp.lt.s32.totalorder %v151, 16
    %vm859 = vcmp.lt.s32.totalorder %v152, 16
    %vm860 = vcmp.lt.s32.totalorder %v153, 16
    %vm861 = vcmp.lt.s32.totalorder %v154, 16
    %v862 = vsel %vm830, %v672, -inf
    %v863 = vsel %vm830, %v674, -inf
    %v864 = vsel %vm831, %v676, -inf
    %v865 = vsel %vm831, %v678, -inf
    %v866 = vsel %vm832, %v682, -inf
    %v867 = vsel %vm832, %v684, -inf
    %v868 = vsel %vm833, %v686, -inf
    %v869 = vsel %vm833, %v688, -inf
    %v870 = vsel %vm834, %v692, -inf
    %v871 = vsel %vm834, %v694, -inf
    %v872 = vsel %vm835, %v696, -inf
    %v873 = vsel %vm835, %v698, -inf
    %v874 = vsel %vm836, %v702, -inf
    %v875 = vsel %vm836, %v704, -inf
    %v876 = vsel %vm837, %v706, -inf
    %v877 = vsel %vm837, %v708, -inf
    %v878 = vsel %vm838, %v712, -inf
    %v879 = vsel %vm838, %v714, -inf
    %v880 = vsel %vm839, %v716, -inf
    %v881 = vsel %vm839, %v718, -inf
    %v882 = vsel %vm840, %v722, -inf
    %v883 = vsel %vm840, %v724, -inf
    %v884 = vsel %vm841, %v726, -inf
    %v885 = vsel %vm841, %v728, -inf
    %v886 = vsel %vm842, %v732, -inf
    %v887 = vsel %vm842, %v734, -inf
    %v888 = vsel %vm843, %v736, -inf
    %v889 = vsel %vm843, %v738, -inf
    %v890 = vsel %vm844, %v742, -inf
    %v891 = vsel %vm844, %v744, -inf
    %v892 = vsel %vm845, %v746, -inf
    %v893 = vsel %vm845, %v748, -inf
    %v894 = vsel %vm846, %v752, -inf
    %v895 = vsel %vm846, %v754, -inf
    %v896 = vsel %vm847, %v756, -inf
    %v897 = vsel %vm847, %v758, -inf
    %v898 = vsel %vm848, %v762, -inf
    %v899 = vsel %vm848, %v764, -inf
    %v900 = vsel %vm849, %v766, -inf
    %v901 = vsel %vm849, %v768, -inf
    %v902 = vsel %vm850, %v772, -inf
    %v903 = vsel %vm850, %v774, -inf
    %v904 = vsel %vm851, %v776, -inf
    %v905 = vsel %vm851, %v778, -inf
    %v906 = vsel %vm852, %v782, -inf
    %v907 = vsel %vm852, %v784, -inf
    %v908 = vsel %vm853, %v786, -inf
    %v909 = vsel %vm853, %v788, -inf
    %v910 = vsel %vm854, %v792, -inf
    %v911 = vsel %vm854, %v794, -inf
    %v912 = vsel %vm855, %v796, -inf
    %v913 = vsel %vm855, %v798, -inf
    %v914 = vsel %vm856, %v802, -inf
    %v915 = vsel %vm856, %v804, -inf
    %v916 = vsel %vm857, %v806, -inf
    %v917 = vsel %vm857, %v808, -inf
    %v918 = vsel %vm858, %v812, -inf
    %v919 = vsel %vm858, %v814, -inf
    %v920 = vsel %vm859, %v816, -inf
    %v921 = vsel %vm859, %v818, -inf
    %v922 = vsel %vm860, %v822, -inf
    %v923 = vsel %vm860, %v824, -inf
    %v924 = vsel %vm861, %v826, -inf
    %v925 = vsel %vm861, %v828, -inf
    %v926 = vmax.f32 %v862, %v866
    %v927 = vmax.f32 %v864, %v868
    %v928 = vmax.f32 %v926, %v870
    %v929 = vmax.f32 %v927, %v872
    %v930 = vmax.f32 %v928, %v874
    %v931 = vmax.f32 %v929, %v876
    %v932 = vmax.f32 %v930, %v878
    %v933 = vmax.f32 %v931, %v880
    %v934 = vmax.f32 %v932, %v882
    %v935 = vmax.f32 %v933, %v884
    %v936 = vmax.f32 %v934, %v886
    %v937 = vmax.f32 %v935, %v888
    %v938 = vmax.f32 %v936, %v890
    %v939 = vmax.f32 %v937, %v892
    %v940 = vmax.f32 %v938, %v894
    %v941 = vmax.f32 %v939, %v896
    %v942 = vmax.f32 %v940, %v898
    %v943 = vmax.f32 %v941, %v900
    %v944 = vmax.f32 %v942, %v902
    %v945 = vmax.f32 %v943, %v904
    %v946 = vmax.f32 %v944, %v906
    %v947 = vmax.f32 %v945, %v908
    %v948 = vmax.f32 %v946, %v910
    %v949 = vmax.f32 %v947, %v912
    %v950 = vmax.f32 %v948, %v914
    %v951 = vmax.f32 %v949, %v916
    %v952 = vmax.f32 %v950, %v918
    %v953 = vmax.f32 %v951, %v920
    %v954 = vmax.f32 %v952, %v922
    %v955 = vmax.f32 %v953, %v924
    %v956 = vmax.f32 %v954, %v955
    %v957 = vrot.slane %v956, 4
    %v958 = vmax.f32 %v956, %v957
    %v959 = vrot.slane %v958, 2
    %v960 = vmax.f32 %v958, %v959
    %v961 = vrot.slane %v960, 1
    %v962 = vmax.f32 %v960, %v961
    %v963 = vmax.f32 %v863, %v867
    %v964 = vmax.f32 %v865, %v869
    %v965 = vmax.f32 %v963, %v871
    %v966 = vmax.f32 %v964, %v873
    %v967 = vmax.f32 %v965, %v875
    %v968 = vmax.f32 %v966, %v877
    %v969 = vmax.f32 %v967, %v879
    %v970 = vmax.f32 %v968, %v881
    %v971 = vmax.f32 %v969, %v883
    %v972 = vmax.f32 %v970, %v885
    %v973 = vmax.f32 %v971, %v887
    %v974 = vmax.f32 %v972, %v889
    %v975 = vmax.f32 %v973, %v891
    %v976 = vmax.f32 %v974, %v893
    %v977 = vmax.f32 %v975, %v895
    %v978 = vmax.f32 %v976, %v897
    %v979 = vmax.f32 %v977, %v899
    %v980 = vmax.f32 %v978, %v901
    %v981 = vmax.f32 %v979, %v903
    %v982 = vmax.f32 %v980, %v905
    %v983 = vmax.f32 %v981, %v907
    %v984 = vmax.f32 %v982, %v909
    %v985 = vmax.f32 %v983, %v911
    %v986 = vmax.f32 %v984, %v913
    %v987 = vmax.f32 %v985, %v915
    %v988 = vmax.f32 %v986, %v917
    %v989 = vmax.f32 %v987, %v919
    %v990 = vmax.f32 %v988, %v921
    %v991 = vmax.f32 %v989, %v923
    %v992 = vmax.f32 %v990, %v925
    %v993 = vmax.f32 %v991, %v992
    %v994 = vrot.slane %v993, 4
    %v995 = vmax.f32 %v993, %v994
    %v996 = vrot.slane %v995, 2
    %v997 = vmax.f32 %v995, %v996
    %v998 = vrot.slane %v997, 1
    %v999 = vmax.f32 %v997, %v998
    %vm1000 = vcmp.eq.f32.partialorder %v862, %v962
    %vm1001 = vcmp.eq.f32.partialorder %v863, %v999
    %vm1002 = vcmp.eq.f32.partialorder %v864, %v962
    %vm1003 = vcmp.eq.f32.partialorder %v865, %v999
    %vm1004 = vcmp.eq.f32.partialorder %v866, %v962
    %vm1005 = vcmp.eq.f32.partialorder %v867, %v999
    %vm1006 = vcmp.eq.f32.partialorder %v868, %v962
    %vm1007 = vcmp.eq.f32.partialorder %v869, %v999
    %vm1008 = vcmp.eq.f32.partialorder %v870, %v962
    %vm1009 = vcmp.eq.f32.partialorder %v871, %v999
    %vm1010 = vcmp.eq.f32.partialorder %v872, %v962
    %vm1011 = vcmp.eq.f32.partialorder %v873, %v999
    %vm1012 = vcmp.eq.f32.partialorder %v874, %v962
    %vm1013 = vcmp.eq.f32.partialorder %v875, %v999
    %vm1014 = vcmp.eq.f32.partialorder %v876, %v962
    %vm1015 = vcmp.eq.f32.partialorder %v877, %v999
    %vm1016 = vcmp.eq.f32.partialorder %v878, %v962
    %vm1017 = vcmp.eq.f32.partialorder %v879, %v999
    %vm1018 = vcmp.eq.f32.partialorder %v880, %v962
    %vm1019 = vcmp.eq.f32.partialorder %v881, %v999
    %vm1020 = vcmp.eq.f32.partialorder %v882, %v962
    %vm1021 = vcmp.eq.f32.partialorder %v883, %v999
    %vm1022 = vcmp.eq.f32.partialorder %v884, %v962
    %vm1023 = vcmp.eq.f32.partialorder %v885, %v999
    %vm1024 = vcmp.eq.f32.partialorder %v886, %v962
    %vm1025 = vcmp.eq.f32.partialorder %v887, %v999
    %vm1026 = vcmp.eq.f32.partialorder %v888, %v962
    %vm1027 = vcmp.eq.f32.partialorder %v889, %v999
    %vm1028 = vcmp.eq.f32.partialorder %v890, %v962
    %vm1029 = vcmp.eq.f32.partialorder %v891, %v999
    %vm1030 = vcmp.eq.f32.partialorder %v892, %v962
    %vm1031 = vcmp.eq.f32.partialorder %v893, %v999
    %vm1032 = vcmp.eq.f32.partialorder %v894, %v962
    %vm1033 = vcmp.eq.f32.partialorder %v895, %v999
    %vm1034 = vcmp.eq.f32.partialorder %v896, %v962
    %vm1035 = vcmp.eq.f32.partialorder %v897, %v999
    %vm1036 = vcmp.eq.f32.partialorder %v898, %v962
    %vm1037 = vcmp.eq.f32.partialorder %v899, %v999
    %vm1038 = vcmp.eq.f32.partialorder %v900, %v962
    %vm1039 = vcmp.eq.f32.partialorder %v901, %v999
    %vm1040 = vcmp.eq.f32.partialorder %v902, %v962
    %vm1041 = vcmp.eq.f32.partialorder %v903, %v999
    %vm1042 = vcmp.eq.f32.partialorder %v904, %v962
    %vm1043 = vcmp.eq.f32.partialorder %v905, %v999
    %vm1044 = vcmp.eq.f32.partialorder %v906, %v962
    %vm1045 = vcmp.eq.f32.partialorder %v907, %v999
    %vm1046 = vcmp.eq.f32.partialorder %v908, %v962
    %vm1047 = vcmp.eq.f32.partialorder %v909, %v999
    %vm1048 = vcmp.eq.f32.partialorder %v910, %v962
    %vm1049 = vcmp.eq.f32.partialorder %v911, %v999
    %vm1050 = vcmp.eq.f32.partialorder %v912, %v962
    %vm1051 = vcmp.eq.f32.partialorder %v913, %v999
    %vm1052 = vcmp.eq.f32.partialorder %v914, %v962
    %vm1053 = vcmp.eq.f32.partialorder %v915, %v999
    %vm1054 = vcmp.eq.f32.partialorder %v916, %v962
    %vm1055 = vcmp.eq.f32.partialorder %v917, %v999
    %vm1056 = vcmp.eq.f32.partialorder %v918, %v962
    %vm1057 = vcmp.eq.f32.partialorder %v919, %v999
    %vm1058 = vcmp.eq.f32.partialorder %v920, %v962
    %vm1059 = vcmp.eq.f32.partialorder %v921, %v999
    %vm1060 = vcmp.eq.f32.partialorder %v922, %v962
    %vm1061 = vcmp.eq.f32.partialorder %v923, %v999
    %vm1062 = vcmp.eq.f32.partialorder %v924, %v962
    %vm1063 = vcmp.eq.f32.partialorder %v925, %v999
    %v1064 = vsel %vm1000, %v123, 1073741824
    %v1065 = vsel %vm1001, %v123, 1073741824
    %v1066 = vsel %vm1002, %v124, 1073741824
    %v1067 = vsel %vm1003, %v124, 1073741824
    %v1068 = vsel %vm1004, %v125, 1073741824
    %v1069 = vsel %vm1005, %v125, 1073741824
    %v1070 = vsel %vm1006, %v126, 1073741824
    %v1071 = vsel %vm1007, %v126, 1073741824
    %v1072 = vsel %vm1008, %v127, 1073741824
    %v1073 = vsel %vm1009, %v127, 1073741824
    %v1074 = vsel %vm1010, %v128, 1073741824
    %v1075 = vsel %vm1011, %v128, 1073741824
    %v1076 = vsel %vm1012, %v129, 1073741824
    %v1077 = vsel %vm1013, %v129, 1073741824
    %v1078 = vsel %vm1014, %v130, 1073741824
    %v1079 = vsel %vm1015, %v130, 1073741824
    %v1080 = vsel %vm1016, %v131, 1073741824
    %v1081 = vsel %vm1017, %v131, 1073741824
    %v1082 = vsel %vm1018, %v132, 1073741824
    %v1083 = vsel %vm1019, %v132, 1073741824
    %v1084 = vsel %vm1020, %v133, 1073741824
    %v1085 = vsel %vm1021, %v133, 1073741824
    %v1086 = vsel %vm1022, %v134, 1073741824
    %v1087 = vsel %vm1023, %v134, 1073741824
    %v1088 = vsel %vm1024, %v135, 1073741824
    %v1089 = vsel %vm1025, %v135, 1073741824
    %v1090 = vsel %vm1026, %v136, 1073741824
    %v1091 = vsel %vm1027, %v136, 1073741824
    %v1092 = vsel %vm1028, %v137, 1073741824
    %v1093 = vsel %vm1029, %v137, 1073741824
    %v1094 = vsel %vm1030, %v138, 1073741824
    %v1095 = vsel %vm1031, %v138, 1073741824
    %v1096 = vsel %vm1032, %v139, 1073741824
    %v1097 = vsel %vm1033, %v139, 1073741824
    %v1098 = vsel %vm1034, %v140, 1073741824
    %v1099 = vsel %vm1035, %v140, 1073741824
    %v1100 = vsel %vm1036, %v141, 1073741824
    %v1101 = vsel %vm1037, %v141, 1073741824
    %v1102 = vsel %vm1038, %v142, 1073741824
    %v1103 = vsel %vm1039, %v142, 1073741824
    %v1104 = vsel %vm1040, %v143, 1073741824
    %v1105 = vsel %vm1041, %v143, 1073741824
    %v1106 = vsel %vm1042, %v144, 1073741824
    %v1107 = vsel %vm1043, %v144, 1073741824
    %v1108 = vsel %vm1044, %v145, 1073741824
    %v1109 = vsel %vm1045, %v145, 1073741824
    %v1110 = vsel %vm1046, %v146, 1073741824
    %v1111 = vsel %vm1047, %v146, 1073741824
    %v1112 = vsel %vm1048, %v147, 1073741824
    %v1113 = vsel %vm1049, %v147, 1073741824
    %v1114 = vsel %vm1050, %v148, 1073741824
    %v1115 = vsel %vm1051, %v148, 1073741824
    %v1116 = vsel %vm1052, %v149, 1073741824
    %v1117 = vsel %vm1053, %v149, 1073741824
    %v1118 = vsel %vm1054, %v150, 1073741824
    %v1119 = vsel %vm1055, %v150, 1073741824
    %v1120 = vsel %vm1056, %v151, 1073741824
    %v1121 = vsel %vm1057, %v151, 1073741824
    %v1122 = vsel %vm1058, %v152, 1073741824
    %v1123 = vsel %vm1059, %v152, 1073741824
    %v1124 = vsel %vm1060, %v153, 1073741824
    %v1125 = vsel %vm1061, %v153, 1073741824
    %v1126 = vsel %vm1062, %v154, 1073741824
    %v1127 = vsel %vm1063, %v154, 1073741824
    %vm1128 = vcmp.lt.s32.totalorder %v1064, %v1068
    %v1129 = vsel %vm1128, %v1064, %v1068
    %vm1130 = vcmp.lt.s32.totalorder %v1066, %v1070
    %v1131 = vsel %vm1130, %v1066, %v1070
    %vm1132 = vcmp.lt.s32.totalorder %v1129, %v1072
    %v1133 = vsel %vm1132, %v1129, %v1072
    %vm1134 = vcmp.lt.s32.totalorder %v1131, %v1074
    %v1135 = vsel %vm1134, %v1131, %v1074
    %vm1136 = vcmp.lt.s32.totalorder %v1133, %v1076
    %v1137 = vsel %vm1136, %v1133, %v1076
    %vm1138 = vcmp.lt.s32.totalorder %v1135, %v1078
    %v1139 = vsel %vm1138, %v1135, %v1078
    %vm1140 = vcmp.lt.s32.totalorder %v1137, %v1080
    %v1141 = vsel %vm1140, %v1137, %v1080
    %vm1142 = vcmp.lt.s32.totalorder %v1139, %v1082
    %v1143 = vsel %vm1142, %v1139, %v1082
    %vm1144 = vcmp.lt.s32.totalorder %v1141, %v1084
    %v1145 = vsel %vm1144, %v1141, %v1084
    %vm1146 = vcmp.lt.s32.totalorder %v1143, %v1086
    %v1147 = vsel %vm1146, %v1143, %v1086
    %vm1148 = vcmp.lt.s32.totalorder %v1145, %v1088
    %v1149 = vsel %vm1148, %v1145, %v1088
    %vm1150 = vcmp.lt.s32.totalorder %v1147, %v1090
    %v1151 = vsel %vm1150, %v1147, %v1090
    %vm1152 = vcmp.lt.s32.totalorder %v1149, %v1092
    %v1153 = vsel %vm1152, %v1149, %v1092
    %vm1154 = vcmp.lt.s32.totalorder %v1151, %v1094
    %v1155 = vsel %vm1154, %v1151, %v1094
    %vm1156 = vcmp.lt.s32.totalorder %v1153, %v1096
    %v1157 = vsel %vm1156, %v1153, %v1096
    %vm1158 = vcmp.lt.s32.totalorder %v1155, %v1098
    %v1159 = vsel %vm1158, %v1155, %v1098
    %vm1160 = vcmp.lt.s32.totalorder %v1157, %v1100
    %v1161 = vsel %vm1160, %v1157, %v1100
    %vm1162 = vcmp.lt.s32.totalorder %v1159, %v1102
    %v1163 = vsel %vm1162, %v1159, %v1102
    %vm1164 = vcmp.lt.s32.totalorder %v1161, %v1104
    %v1165 = vsel %vm1164, %v1161, %v1104
    %vm1166 = vcmp.lt.s32.totalorder %v1163, %v1106
    %v1167 = vsel %vm1166, %v1163, %v1106
    %vm1168 = vcmp.lt.s32.totalorder %v1165, %v1108
    %v1169 = vsel %vm1168, %v1165, %v1108
    %vm1170 = vcmp.lt.s32.totalorder %v1167, %v1110
    %v1171 = vsel %vm1170, %v1167, %v1110
    %vm1172 = vcmp.lt.s32.totalorder %v1169, %v1112
    %v1173 = vsel %vm1172, %v1169, %v1112
    %vm1174 = vcmp.lt.s32.totalorder %v1171, %v1114
    %v1175 = vsel %vm1174, %v1171, %v1114
    %vm1176 = vcmp.lt.s32.totalorder %v1173, %v1116
    %v1177 = vsel %vm1176, %v1173, %v1116
    %vm1178 = vcmp.lt.s32.totalorder %v1175, %v1118
    %v1179 = vsel %vm1178, %v1175, %v1118
    %vm1180 = vcmp.lt.s32.totalorder %v1177, %v1120
    %v1181 = vsel %vm1180, %v1177, %v1120
    %vm1182 = vcmp.lt.s32.totalorder %v1179, %v1122
    %v1183 = vsel %vm1182, %v1179, %v1122
    %vm1184 = vcmp.lt.s32.totalorder %v1181, %v1124
    %v1185 = vsel %vm1184, %v1181, %v1124
    %vm1186 = vcmp.lt.s32.totalorder %v1183, %v1126
    %v1187 = vsel %vm1186, %v1183, %v1126
    %vm1188 = vcmp.lt.s32.totalorder %v1185, %v1187
    %v1189 = vsel %vm1188, %v1185, %v1187
    %v1190 = vrot.slane %v1189, 4
    %vm1191 = vcmp.lt.s32.totalorder %v1189, %v1190
    %v1192 = vsel %vm1191, %v1189, %v1190
    %v1193 = vrot.slane %v1192, 2
    %vm1194 = vcmp.lt.s32.totalorder %v1192, %v1193
    %v1195 = vsel %vm1194, %v1192, %v1193
    %v1196 = vrot.slane %v1195, 1
    %vm1197 = vcmp.lt.s32.totalorder %v1195, %v1196
    %v1198 = vsel %vm1197, %v1195, %v1196
    %vm1199 = vcmp.lt.s32.totalorder %v1065, %v1069
    %v1200 = vsel %vm1199, %v1065, %v1069
    %vm1201 = vcmp.lt.s32.totalorder %v1067, %v1071
    %v1202 = vsel %vm1201, %v1067, %v1071
    %vm1203 = vcmp.lt.s32.totalorder %v1200, %v1073
    %v1204 = vsel %vm1203, %v1200, %v1073
    %vm1205 = vcmp.lt.s32.totalorder %v1202, %v1075
    %v1206 = vsel %vm1205, %v1202, %v1075
    %vm1207 = vcmp.lt.s32.totalorder %v1204, %v1077
    %v1208 = vsel %vm1207, %v1204, %v1077
    %vm1209 = vcmp.lt.s32.totalorder %v1206, %v1079
    %v1210 = vsel %vm1209, %v1206, %v1079
    %vm1211 = vcmp.lt.s32.totalorder %v1208, %v1081
    %v1212 = vsel %vm1211, %v1208, %v1081
    %vm1213 = vcmp.lt.s32.totalorder %v1210, %v1083
    %v1214 = vsel %vm1213, %v1210, %v1083
    %vm1215 = vcmp.lt.s32.totalorder %v1212, %v1085
    %v1216 = vsel %vm1215, %v1212, %v1085
    %vm1217 = vcmp.lt.s32.totalorder %v1214, %v1087
    %v1218 = vsel %vm1217, %v1214, %v1087
    %vm1219 = vcmp.lt.s32.totalorder %v1216, %v1089
    %v1220 = vsel %vm1219, %v1216, %v1089
    %vm1221 = vcmp.lt.s32.totalorder %v1218, %v1091
    %v1222 = vsel %vm1221, %v1218, %v1091
    %vm1223 = vcmp.lt.s32.totalorder %v1220, %v1093
    %v1224 = vsel %vm1223, %v1220, %v1093
    %vm1225 = vcmp.lt.s32.totalorder %v1222, %v1095
    %v1226 = vsel %vm1225, %v1222, %v1095
    %vm1227 = vcmp.lt.s32.totalorder %v1224, %v1097
    %v1228 = vsel %vm1227, %v1224, %v1097
    %vm1229 = vcmp.lt.s32.totalorder %v1226, %v1099
    %v1230 = vsel %vm1229, %v1226, %v1099
    %vm1231 = vcmp.lt.s32.totalorder %v1228, %v1101
    %v1232 = vsel %vm1231, %v1228, %v1101
    %vm1233 = vcmp.lt.s32.totalorder %v1230, %v1103
    %v1234 = vsel %vm1233, %v1230, %v1103
    %vm1235 = vcmp.lt.s32.totalorder %v1232, %v1105
    %v1236 = vsel %vm1235, %v1232, %v1105
    %vm1237 = vcmp.lt.s32.totalorder %v1234, %v1107
    %v1238 = vsel %vm1237, %v1234, %v1107
    %vm1239 = vcmp.lt.s32.totalorder %v1236, %v1109
    %v1240 = vsel %vm1239, %v1236, %v1109
    %vm1241 = vcmp.lt.s32.totalorder %v1238, %v1111
    %v1242 = vsel %vm1241, %v1238, %v1111
    %vm1243 = vcmp.lt.s32.totalorder %v1240, %v1113
    %v1244 = vsel %vm1243, %v1240, %v1113
    %vm1245 = vcmp.lt.s32.totalorder %v1242, %v1115
    %v1246 = vsel %vm1245, %v1242, %v1115
    %vm1247 = vcmp.lt.s32.totalorder %v1244, %v1117
    %v1248 = vsel %vm1247, %v1244, %v1117
    %vm1249 = vcmp.lt.s32.totalorder %v1246, %v1119
    %v1250 = vsel %vm1249, %v1246, %v1119
    %vm1251 = vcmp.lt.s32.totalorder %v1248, %v1121
    %v1252 = vsel %vm1251, %v1248, %v1121
    %vm1253 = vcmp.lt.s32.totalorder %v1250, %v1123
    %v1254 = vsel %vm1253, %v1250, %v1123
    %vm1255 = vcmp.lt.s32.totalorder %v1252, %v1125
    %v1256 = vsel %vm1255, %v1252, %v1125
    %vm1257 = vcmp.lt.s32.totalorder %v1254, %v1127
    %v1258 = vsel %vm1257, %v1254, %v1127
    %vm1259 = vcmp.lt.s32.totalorder %v1256, %v1258
    %v1260 = vsel %vm1259, %v1256, %v1258
    %v1261 = vrot.slane %v1260, 4
    %vm1262 = vcmp.lt.s32.totalorder %v1260, %v1261
    %v1263 = vsel %vm1262, %v1260, %v1261
    %v1264 = vrot.slane %v1263, 2
    %vm1265 = vcmp.lt.s32.totalorder %v1263, %v1264
    %v1266 = vsel %vm1265, %v1263, %v1264
    %v1267 = vrot.slane %v1266, 1
    %vm1268 = vcmp.lt.s32.totalorder %v1266, %v1267
    %v1269 = vsel %vm1268, %v1266, %v1267
    %vm1270 = vcmp.gt.f32.partialorder %v962, -inf
    %vm1271 = vcmp.gt.f32.partialorder %v999, -inf
    %v1272 = vsel %vm1270, %v1198, 0
    %v1273 = vsel %vm1271, %v1269, 0
    %v1274 = vcombine.low %v1272, %v1273
    %v1276 = vunpack.c.l.s4 1966171168
    %v1277 = vunpack.c.0.s8 %v1276
    %v1278 = vlaneseq
    %v1279 = vshrl.u32 %v1278, 7
    %v1280 = vsub.s32 %v1277, %v1279
    %v1281 = vrot.slane %v1274, %v1280
    %v1283 = vunpack.c.l.s4 1966171168
    %v1284 = vunpack.c.0.s8 %v1283
    %v1285 = vlaneseq
    %v1286 = vshrl.u32 %v1285, 7
    %v1287 = vsub.s32 %v1284, %v1286
    %v1288 = vrot.slane %v1281, %v1287
    %v1289 = vsel %vm120, %v1288, %v117
    %v1290 = vlaneseq
    %v1291 = vshrl.u32 %v1290, 7
    %v1292 = vsub.s32 0, %v1291
    %v1293 = vrot.slane %v1289, %v1292
    %v1294 = vlaneseq
    %v1295 = vshrl.u32 %v1294, 7
    %v1296 = vsub.s32 1, %v1295
    %v1297 = vrot.slane %v1289, %v1296
    %vm1298 = vcmp.eq.s32.totalorder %v123, %v1293
    %vm1299 = vcmp.eq.s32.totalorder %v123, %v1297
    %vm1300 = vcmp.eq.s32.totalorder %v124, %v1293
    %vm1301 = vcmp.eq.s32.totalorder %v124, %v1297
    %vm1302 = vcmp.eq.s32.totalorder %v125, %v1293
    %vm1303 = vcmp.eq.s32.totalorder %v125, %v1297
    %vm1304 = vcmp.eq.s32.totalorder %v126, %v1293
    %vm1305 = vcmp.eq.s32.totalorder %v126, %v1297
    %vm1306 = vcmp.eq.s32.totalorder %v127, %v1293
    %vm1307 = vcmp.eq.s32.totalorder %v127, %v1297
    %vm1308 = vcmp.eq.s32.totalorder %v128, %v1293
    %vm1309 = vcmp.eq.s32.totalorder %v128, %v1297
    %vm1310 = vcmp.eq.s32.totalorder %v129, %v1293
    %vm1311 = vcmp.eq.s32.totalorder %v129, %v1297
    %vm1312 = vcmp.eq.s32.totalorder %v130, %v1293
    %vm1313 = vcmp.eq.s32.totalorder %v130, %v1297
    %vm1314 = vcmp.eq.s32.totalorder %v131, %v1293
    %vm1315 = vcmp.eq.s32.totalorder %v131, %v1297
    %vm1316 = vcmp.eq.s32.totalorder %v132, %v1293
    %vm1317 = vcmp.eq.s32.totalorder %v132, %v1297
    %vm1318 = vcmp.eq.s32.totalorder %v133, %v1293
    %vm1319 = vcmp.eq.s32.totalorder %v133, %v1297
    %vm1320 = vcmp.eq.s32.totalorder %v134, %v1293
    %vm1321 = vcmp.eq.s32.totalorder %v134, %v1297
    %vm1322 = vcmp.eq.s32.totalorder %v135, %v1293
    %vm1323 = vcmp.eq.s32.totalorder %v135, %v1297
    %vm1324 = vcmp.eq.s32.totalorder %v136, %v1293
    %vm1325 = vcmp.eq.s32.totalorder %v136, %v1297
    %vm1326 = vcmp.eq.s32.totalorder %v137, %v1293
    %vm1327 = vcmp.eq.s32.totalorder %v137, %v1297
    %vm1328 = vcmp.eq.s32.totalorder %v138, %v1293
    %vm1329 = vcmp.eq.s32.totalorder %v138, %v1297
    %vm1330 = vcmp.eq.s32.totalorder %v139, %v1293
    %vm1331 = vcmp.eq.s32.totalorder %v139, %v1297
    %vm1332 = vcmp.eq.s32.totalorder %v140, %v1293
    %vm1333 = vcmp.eq.s32.totalorder %v140, %v1297
    %vm1334 = vcmp.eq.s32.totalorder %v141, %v1293
    %vm1335 = vcmp.eq.s32.totalorder %v141, %v1297
    %vm1336 = vcmp.eq.s32.totalorder %v142, %v1293
    %vm1337 = vcmp.eq.s32.totalorder %v142, %v1297
    %vm1338 = vcmp.eq.s32.totalorder %v143, %v1293
    %vm1339 = vcmp.eq.s32.totalorder %v143, %v1297
    %vm1340 = vcmp.eq.s32.totalorder %v144, %v1293
    %vm1341 = vcmp.eq.s32.totalorder %v144, %v1297
    %vm1342 = vcmp.eq.s32.totalorder %v145, %v1293
    %vm1343 = vcmp.eq.s32.totalorder %v145, %v1297
    %vm1344 = vcmp.eq.s32.totalorder %v146, %v1293
    %vm1345 = vcmp.eq.s32.totalorder %v146, %v1297
    %vm1346 = vcmp.eq.s32.totalorder %v147, %v1293
    %vm1347 = vcmp.eq.s32.totalorder %v147, %v1297
    %vm1348 = vcmp.eq.s32.totalorder %v148, %v1293
    %vm1349 = vcmp.eq.s32.totalorder %v148, %v1297
    %vm1350 = vcmp.eq.s32.totalorder %v149, %v1293
    %vm1351 = vcmp.eq.s32.totalorder %v149, %v1297
    %vm1352 = vcmp.eq.s32.totalorder %v150, %v1293
    %vm1353 = vcmp.eq.s32.totalorder %v150, %v1297
    %vm1354 = vcmp.eq.s32.totalorder %v151, %v1293
    %vm1355 = vcmp.eq.s32.totalorder %v151, %v1297
    %vm1356 = vcmp.eq.s32.totalorder %v152, %v1293
    %vm1357 = vcmp.eq.s32.totalorder %v152, %v1297
    %vm1358 = vcmp.eq.s32.totalorder %v153, %v1293
    %vm1359 = vcmp.eq.s32.totalorder %v153, %v1297
    %vm1360 = vcmp.eq.s32.totalorder %v154, %v1293
    %vm1361 = vcmp.eq.s32.totalorder %v154, %v1297
    %v1362 = vsel %vm1298, 1, 0
    %v1363 = vsel %vm1299, 1, 0
    %v1364 = vsel %vm1300, 1, 0
    %v1365 = vsel %vm1301, 1, 0
    %v1366 = vsel %vm1302, 1, 0
    %v1367 = vsel %vm1303, 1, 0
    %v1368 = vsel %vm1304, 1, 0
    %v1369 = vsel %vm1305, 1, 0
    %v1370 = vsel %vm1306, 1, 0
    %v1371 = vsel %vm1307, 1, 0
    %v1372 = vsel %vm1308, 1, 0
    %v1373 = vsel %vm1309, 1, 0
    %v1374 = vsel %vm1310, 1, 0
    %v1375 = vsel %vm1311, 1, 0
    %v1376 = vsel %vm1312, 1, 0
    %v1377 = vsel %vm1313, 1, 0
    %v1378 = vsel %vm1314, 1, 0
    %v1379 = vsel %vm1315, 1, 0
    %v1380 = vsel %vm1316, 1, 0
    %v1381 = vsel %vm1317, 1, 0
    %v1382 = vsel %vm1318, 1, 0
    %v1383 = vsel %vm1319, 1, 0
    %v1384 = vsel %vm1320, 1, 0
    %v1385 = vsel %vm1321, 1, 0
    %v1386 = vsel %vm1322, 1, 0
    %v1387 = vsel %vm1323, 1, 0
    %v1388 = vsel %vm1324, 1, 0
    %v1389 = vsel %vm1325, 1, 0
    %v1390 = vsel %vm1326, 1, 0
    %v1391 = vsel %vm1327, 1, 0
    %v1392 = vsel %vm1328, 1, 0
    %v1393 = vsel %vm1329, 1, 0
    %v1394 = vsel %vm1330, 1, 0
    %v1395 = vsel %vm1331, 1, 0
    %v1396 = vsel %vm1332, 1, 0
    %v1397 = vsel %vm1333, 1, 0
    %v1398 = vsel %vm1334, 1, 0
    %v1399 = vsel %vm1335, 1, 0
    %v1400 = vsel %vm1336, 1, 0
    %v1401 = vsel %vm1337, 1, 0
    %v1402 = vsel %vm1338, 1, 0
    %v1403 = vsel %vm1339, 1, 0
    %v1404 = vsel %vm1340, 1, 0
    %v1405 = vsel %vm1341, 1, 0
    %v1406 = vsel %vm1342, 1, 0
    %v1407 = vsel %vm1343, 1, 0
    %v1408 = vsel %vm1344, 1, 0
    %v1409 = vsel %vm1345, 1, 0
    %v1410 = vsel %vm1346, 1, 0
    %v1411 = vsel %vm1347, 1, 0
    %v1412 = vsel %vm1348, 1, 0
    %v1413 = vsel %vm1349, 1, 0
    %v1414 = vsel %vm1350, 1, 0
    %v1415 = vsel %vm1351, 1, 0
    %v1416 = vsel %vm1352, 1, 0
    %v1417 = vsel %vm1353, 1, 0
    %v1418 = vsel %vm1354, 1, 0
    %v1419 = vsel %vm1355, 1, 0
    %v1420 = vsel %vm1356, 1, 0
    %v1421 = vsel %vm1357, 1, 0
    %v1422 = vsel %vm1358, 1, 0
    %v1423 = vsel %vm1359, 1, 0
    %v1424 = vsel %vm1360, 1, 0
    %v1425 = vsel %vm1361, 1, 0
    %v1426 = vcvt.s32.f32 %v1362
    %v1427 = vcvt.s32.f32 %v1363
    %v1428 = vcvt.s32.f32 %v1364
    %v1429 = vcvt.s32.f32 %v1365
    %v1430 = vcvt.s32.f32 %v1366
    %v1431 = vcvt.s32.f32 %v1367
    %v1432 = vcvt.s32.f32 %v1368
    %v1433 = vcvt.s32.f32 %v1369
    %v1434 = vcvt.s32.f32 %v1370
    %v1435 = vcvt.s32.f32 %v1371
    %v1436 = vcvt.s32.f32 %v1372
    %v1437 = vcvt.s32.f32 %v1373
    %v1438 = vcvt.s32.f32 %v1374
    %v1439 = vcvt.s32.f32 %v1375
    %v1440 = vcvt.s32.f32 %v1376
    %v1441 = vcvt.s32.f32 %v1377
    %v1442 = vcvt.s32.f32 %v1378
    %v1443 = vcvt.s32.f32 %v1379
    %v1444 = vcvt.s32.f32 %v1380
    %v1445 = vcvt.s32.f32 %v1381
    %v1446 = vcvt.s32.f32 %v1382
    %v1447 = vcvt.s32.f32 %v1383
    %v1448 = vcvt.s32.f32 %v1384
    %v1449 = vcvt.s32.f32 %v1385
    %v1450 = vcvt.s32.f32 %v1386
    %v1451 = vcvt.s32.f32 %v1387
    %v1452 = vcvt.s32.f32 %v1388
    %v1453 = vcvt.s32.f32 %v1389
    %v1454 = vcvt.s32.f32 %v1390
    %v1455 = vcvt.s32.f32 %v1391
    %v1456 = vcvt.s32.f32 %v1392
    %v1457 = vcvt.s32.f32 %v1393
    %v1458 = vcvt.s32.f32 %v1394
    %v1459 = vcvt.s32.f32 %v1395
    %v1460 = vcvt.s32.f32 %v1396
    %v1461 = vcvt.s32.f32 %v1397
    %v1462 = vcvt.s32.f32 %v1398
    %v1463 = vcvt.s32.f32 %v1399
    %v1464 = vcvt.s32.f32 %v1400
    %v1465 = vcvt.s32.f32 %v1401
    %v1466 = vcvt.s32.f32 %v1402
    %v1467 = vcvt.s32.f32 %v1403
    %v1468 = vcvt.s32.f32 %v1404
    %v1469 = vcvt.s32.f32 %v1405
    %v1470 = vcvt.s32.f32 %v1406
    %v1471 = vcvt.s32.f32 %v1407
    %v1472 = vcvt.s32.f32 %v1408
    %v1473 = vcvt.s32.f32 %v1409
    %v1474 = vcvt.s32.f32 %v1410
    %v1475 = vcvt.s32.f32 %v1411
    %v1476 = vcvt.s32.f32 %v1412
    %v1477 = vcvt.s32.f32 %v1413
    %v1478 = vcvt.s32.f32 %v1414
    %v1479 = vcvt.s32.f32 %v1415
    %v1480 = vcvt.s32.f32 %v1416
    %v1481 = vcvt.s32.f32 %v1417
    %v1482 = vcvt.s32.f32 %v1418
    %v1483 = vcvt.s32.f32 %v1419
    %v1484 = vcvt.s32.f32 %v1420
    %v1485 = vcvt.s32.f32 %v1421
    %v1486 = vcvt.s32.f32 %v1422
    %v1487 = vcvt.s32.f32 %v1423
    %v1488 = vcvt.s32.f32 %v1424
    %v1489 = vcvt.s32.f32 %v1425
    %v1490 = vpack.c.bf16 %v1428, %v1426
    %v1491 = vpack.c.bf16 %v1429, %v1427
    %v1492 = vpack.c.bf16 %v1432, %v1430
    %v1493 = vpack.c.bf16 %v1433, %v1431
    %v1494 = vpack.c.bf16 %v1436, %v1434
    %v1495 = vpack.c.bf16 %v1437, %v1435
    %v1496 = vpack.c.bf16 %v1440, %v1438
    %v1497 = vpack.c.bf16 %v1441, %v1439
    %v1498 = vpack.c.bf16 %v1444, %v1442
    %v1499 = vpack.c.bf16 %v1445, %v1443
    %v1500 = vpack.c.bf16 %v1448, %v1446
    %v1501 = vpack.c.bf16 %v1449, %v1447
    %v1502 = vpack.c.bf16 %v1452, %v1450
    %v1503 = vpack.c.bf16 %v1453, %v1451
    %v1504 = vpack.c.bf16 %v1456, %v1454
    %v1505 = vpack.c.bf16 %v1457, %v1455
    %v1506 = vpack.c.bf16 %v1460, %v1458
    %v1507 = vpack.c.bf16 %v1461, %v1459
    %v1508 = vpack.c.bf16 %v1464, %v1462
    %v1509 = vpack.c.bf16 %v1465, %v1463
    %v1510 = vpack.c.bf16 %v1468, %v1466
    %v1511 = vpack.c.bf16 %v1469, %v1467
    %v1512 = vpack.c.bf16 %v1472, %v1470
    %v1513 = vpack.c.bf16 %v1473, %v1471
    %v1514 = vpack.c.bf16 %v1476, %v1474
    %v1515 = vpack.c.bf16 %v1477, %v1475
    %v1516 = vpack.c.bf16 %v1480, %v1478
    %v1517 = vpack.c.bf16 %v1481, %v1479
    %v1518 = vpack.c.bf16 %v1484, %v1482
    %v1519 = vpack.c.bf16 %v1485, %v1483
    %v1520 = vpack.c.bf16 %v1488, %v1486
    %v1521 = vpack.c.bf16 %v1489, %v1487
    %v1522 = vld [vmem:[#allocation11] sm:$0xff]
    %v1523 = vld [vmem:[#allocation11 + $0x8] sm:$0xff]
    %v1524 = vld [vmem:[#allocation11 + $0x10] sm:$0xff]
    %v1525 = vld [vmem:[#allocation11 + $0x18] sm:$0xff]
    %v1530 = vunpack.c.l.b16 %v1522
    %v1531 = vunpack.c.h.b16 %v1522
    %v1532 = vunpack.c.l.b16 %v1523
    %v1533 = vunpack.c.h.b16 %v1523
    %v1534 = vunpack.c.l.b16 %v1524
    %v1535 = vunpack.c.h.b16 %v1524
    %v1536 = vunpack.c.l.b16 %v1525
    %v1537 = vunpack.c.h.b16 %v1525
    %v1538 = vpack.c.b16 %v1532, %v1530
    %v1539 = vpack.c.b16 %v1533, %v1531
    %v1540 = vpack.c.b16 %v1536, %v1534
    %v1541 = vpack.c.b16 %v1537, %v1535
    %1546 = vmatprep.subr.bf16.mxu0 %v1491
    %1547 = vmatpush1.bf16.msra.mxu0 %v1490
    %1548 = vmatprep.subr.bf16.mxu0 %v1493
    %1549 = vmatpush1.bf16.msra.mxu0 %v1492
    %1550 = vmatprep.subr.bf16.mxu0 %v1495
    %1551 = vmatpush1.bf16.msra.mxu0 %v1494
    %1552 = vmatprep.subr.bf16.mxu0 %v1497
    %1553 = vmatpush1.bf16.msra.mxu0 %v1496
    %1554 = vmatprep.subr.bf16.mxu0 %v1499
    %1555 = vmatpush1.bf16.msra.mxu0 %v1498
    %1556 = vmatprep.subr.bf16.mxu0 %v1501
    %1557 = vmatpush1.bf16.msra.mxu0 %v1500
    %1558 = vmatprep.subr.bf16.mxu0 %v1503
    %1559 = vmatpush1.bf16.msra.mxu0 %v1502
    %1560 = vmatprep.subr.bf16.mxu0 %v1505
    %1561 = vmatpush1.bf16.msra.mxu0 %v1504
    %1562 = vmatprep.subr.bf16.mxu0 %v1507
    %1563 = vmatpush1.bf16.msra.mxu0 %v1506
    %1564 = vmatprep.subr.bf16.mxu0 %v1509
    %1565 = vmatpush1.bf16.msra.mxu0 %v1508
    %1566 = vmatprep.subr.bf16.mxu0 %v1511
    %1567 = vmatpush1.bf16.msra.mxu0 %v1510
    %1568 = vmatprep.subr.bf16.mxu0 %v1513
    %1569 = vmatpush1.bf16.msra.mxu0 %v1512
    %1570 = vmatprep.subr.bf16.mxu0 %v1515
    %1571 = vmatpush1.bf16.msra.mxu0 %v1514
    %1572 = vmatprep.subr.bf16.mxu0 %v1517
    %1573 = vmatpush1.bf16.msra.mxu0 %v1516
    %1574 = vmatprep.subr.bf16.mxu0 %v1519
    %1575 = vmatpush1.bf16.msra.mxu0 %v1518
    %1576 = vmatprep.subr.bf16.mxu0 %v1521
    %1577 = vmatpush1.bf16.msra.mxu0 %v1520
    %1578 = vmatprep.mubr.bf16.mxu0 %v1539
    %1579 = vmatmul.mubr.bf16.gmra.mrb[0].mxu0 %v1538
    %v1580 = vpop.f32.mrb[0].mxu0
    %v1581 = vadd.f32 0.0, %v1580
    %v1582 = vpop.f32.mrb[0].mxu0
    %v1583 = vadd.f32 0.0, %v1582
    %v1584 = vpop.f32.mrb[0].mxu0
    %v1585 = vadd.f32 0.0, %v1584
    %v1586 = vpop.f32.mrb[0].mxu0
    %v1587 = vadd.f32 0.0, %v1586
    %1588 = vmatprep.mubr.bf16.mxu0 %v1541
    %1589 = vmatmul.mubr.bf16.gmra.mrb[0].mxu0 %v1540
    %v1590 = vpop.f32.mrb[0].mxu0
    %v1591 = vadd.f32 0.0, %v1590
    %v1592 = vpop.f32.mrb[0].mxu0
    %v1593 = vadd.f32 0.0, %v1592
    %v1594 = vpop.f32.mrb[0].mxu0
    %v1595 = vadd.f32 0.0, %v1594
    %v1596 = vpop.f32.mrb[0].mxu0
    %v1597 = vadd.f32 0.0, %v1596
    %1598 = vdwg.mxu0
    %v1599 = vtanh.pop %v1581
    %v1600 = vtanh.pop %v1583
    %v1601 = vtanh.pop %v1585
    %v1602 = vtanh.pop %v1587
    %v1603 = vtanh.pop %v1591
    %v1604 = vtanh.pop %v1593
    %v1605 = vtanh.pop %v1595
    %v1606 = vtanh.pop %v1597
    %v1607 = vld [vmem:[#allocation13] sm:$0xff]
    %v1608 = vld [vmem:[#allocation13 + $0x8] sm:$0xff]
    %v1609 = vld [vmem:[#allocation13 + $0x10] sm:$0xff]
    %v1610 = vld [vmem:[#allocation13 + $0x18] sm:$0xff]
    %1612 = vset.pattern.permute.xlu0 0
    %1613 = vperm.xlu0 %1612, %v1607
    %v1614 = vpop.permute.xlu0 %1613
    %1617 = vset.pattern.permute.xlu0 0
    %1618 = vperm.xlu0 %1617, %v1608
    %v1619 = vpop.permute.xlu0 %1618
    %1622 = vset.pattern.permute.xlu0 0
    %1623 = vperm.xlu0 %1622, %v1609
    %v1624 = vpop.permute.xlu0 %1623
    %1627 = vset.pattern.permute.xlu0 0
    %1628 = vperm.xlu0 %1627, %v1610
    %v1629 = vpop.permute.xlu0 %1628
    %v1631 = vmul.f32 %v1599, %v1614
    %v1632 = vmul.f32 %v1600, %v1614
    %v1633 = vmul.f32 %v1601, %v1619
    %v1634 = vmul.f32 %v1602, %v1619
    %v1635 = vmul.f32 %v1603, %v1624
    %v1636 = vmul.f32 %v1604, %v1624
    %v1637 = vmul.f32 %v1605, %v1629
    %v1638 = vmul.f32 %v1606, %v1629
    %v1639 = vadd.f32 %v1631, %v1633
    %v1640 = vadd.f32 %v1639, %v1635
    %v1641 = vadd.f32 %v1640, %v1637
    %v1642 = vrot.slane %v1641, 4
    %v1643 = vadd.f32 %v1641, %v1642
    %v1644 = vrot.slane %v1643, 2
    %v1645 = vadd.f32 %v1643, %v1644
    %v1646 = vrot.slane %v1645, 1
    %v1647 = vadd.f32 %v1645, %v1646
    %v1648 = vadd.f32 %v1632, %v1634
    %v1649 = vadd.f32 %v1648, %v1636
    %v1650 = vadd.f32 %v1649, %v1638
    %v1651 = vrot.slane %v1650, 4
    %v1652 = vadd.f32 %v1650, %v1651
    %v1653 = vrot.slane %v1652, 2
    %v1654 = vadd.f32 %v1652, %v1653
    %v1655 = vrot.slane %v1654, 1
    %v1656 = vadd.f32 %v1654, %v1655
    %v1657 = vmax.f32 %v1647, 0.0
    %v1658 = vmax.f32 %v1656, 0.0
    %v1660 = vlaneseq
    %v1661 = vshrl.u32 %v1660, 7
    %v1662 = vsub.s32 0, %v1661
    %v1663 = vrot.slane %v118, %v1662
    %v1664 = vlaneseq
    %v1665 = vshrl.u32 %v1664, 7
    %v1666 = vsub.s32 1, %v1665
    %v1667 = vrot.slane %v118, %v1666
    %v1670 = vmul.f32 %v1647, %v1663
    %v1671 = vmul.f32 %v1656, %v1667
    %v1672 = vsub.f32 %v1657, %v1670
    %v1673 = vsub.f32 %v1658, %v1671
    %v1674 = vand.u32 2147483647, %v1647
    %v1675 = vand.u32 2147483647, %v1656
    %v1676 = vsub.f32 0.0, %v1674
    %v1677 = vsub.f32 0.0, %v1675
    %v1678 = vmul.f32 %v1676, 1.442695
    %v1679 = vpow.pop %v1678
    %v1680 = vmul.f32 %v1677, 1.442695
    %v1681 = vpow.pop %v1680
    %v1682 = vadd.f32 %v1679, 1.0
    %v1683 = vadd.f32 %v1681, 1.0
    %v1684 = vlog2.pop %v1682
    %v1685 = vmul.f32 %v1684, 0.6931472
    %v1686 = vlog2.pop %v1683
    %v1687 = vmul.f32 %v1686, 0.6931472
    %v1688 = vadd.f32 %v1672, %v1685
    %v1689 = vadd.f32 %v1673, %v1687
    %v1691 = vlaneseq
    %v1692 = vshrl.u32 %v1691, 7
    %v1693 = vsub.s32 0, %v1692
    %v1694 = vrot.slane %v119, %v1693
    %v1695 = vlaneseq
    %v1696 = vshrl.u32 %v1695, 7
    %v1697 = vsub.s32 1, %v1696
    %v1698 = vrot.slane %v119, %v1697
    %v1701 = vmul.f32 %v1688, %v1694
    %v1702 = vmul.f32 %v1689, %v1698
    %v1705 = vcombine.low %v1701, %v1702
    %v1707 = vunpack.c.l.s4 1966171168
    %v1708 = vunpack.c.0.s8 %v1707
    %v1709 = vlaneseq
    %v1710 = vshrl.u32 %v1709, 7
    %v1711 = vsub.s32 %v1708, %v1710
    %v1712 = vrot.slane %v1705, %v1711
    %v1714 = vunpack.c.l.s4 1966171168
    %v1715 = vunpack.c.0.s8 %v1714
    %v1716 = vlaneseq
    %v1717 = vshrl.u32 %v1716, 7
    %v1718 = vsub.s32 %v1715, %v1717
    %v1719 = vrot.slane %v1712, %v1718
    %v1721 = vlaneseq
    %vm1722 = vcmp.ge.s32.totalorder %v1721, 0
    %vm1723 = vcmp.lt.s32.totalorder %v1721, 256
    %vm1724 = vmand %vm1722, %vm1723
    %1725 = vst.msk [vmem:[#allocation14] sm:$0x3] %vm1724, %v1719
    // Predicated region
    $region58: #{tpu_custom_call.1} parent=1 // pred_check
      _
    $region59: #{tpu_custom_call.1} parent=1 // pred_check_branch
      %1727 = sbr.rel (0) target = $region61
    $region60: #{tpu_custom_call.1} parent=1 // pred_region
      %s1729 = ssub.s32 32, 32
      %1730 = vsyncadd [#allocation4], %s1729
      %s1732 = sshll.u32 [#allocation14], 4
      %s1733 = int_to_ptr.vmem [resolvable:$true] %s1732
      %1735 = dma.vmem_to_hbm [thread:$0]  %s1733, 32, %s7, [#allocation4]
    $region61: #{tpu_custom_call.1} parent=1 // pred_fallthru
      _
    // Predicated region
    $region62: #{tpu_custom_call.1} parent=1 // pred_check
      _
    $region63: #{tpu_custom_call.1} parent=1 // pred_check_branch
      %1737 = sbr.rel (0) target = $region65
    $region64: #{tpu_custom_call.1} parent=1 // pred_region
      %1738 = dma.done [#allocation4], 32
    $region65: #{tpu_custom_call.1} parent=1 // pred_fallthru
      _
    %1739 = vsyncpa [#allocation3], 1
    %1740 = vsyncpa [#allocation6], 1
    %1741 = vsyncpa [#allocation9], 1
    %1742 = vsyncpa [#allocation12], 1
    %1743 = vsyncpa [#allocation4], 1

</llo_original>
